<compile_context>
chip_gen: v5e
topology: v5e:2x2
jax: 0.10.0
libtpu: 0.0.40
codegen_flags: <defaults>
</compile_context>

<pallas_src>
import functools

import jax
import jax.numpy as jnp
from jax import lax
from jax.experimental import pallas as pl
from jax.experimental.pallas import tpu as pltpu

NUM_CLASSES = 3


def _round_up(n, m):
    return ((n + m - 1) // m) * m


def _lstm_kernel(x_ref, lens_ref, w_ih_ref, w_hh_ref, b_ref,
                 w_out_ref, b_out_ref, out_ref, h_ref, c_ref, *, hidden_pad):
    Hp = hidden_pad
    t_blk = pl.program_id(1)
    n_t = pl.num_programs(1)

    tc, tb, E = x_ref.shape          # (t_chunk, batch_tile, embed)

    @pl.when(t_blk == 0)
    def _():
        h_ref[...] = jnp.zeros_like(h_ref)
        c_ref[...] = jnp.zeros_like(c_ref)

    # ---- hoisted input projection: one MXU matmul for the whole time chunk ----
    # (t_chunk, tb, E) -> (t_chunk*tb, E) is a free relayout because tb % 8 == 0.
    x_flat = x_ref[...].reshape(tc * tb, E)
    gx = (jnp.dot(x_flat, w_ih_ref[...], preferred_element_type=jnp.float32)
          + b_ref[...]).reshape(tc, tb, 4 * Hp)

    # loop-invariant loads, hoisted out of the recurrence
    lens = lens_ref[...]             # (tb, 1) int32
    w_hh = w_hh_ref[...]             # (Hp, 4Hp)
    t0 = t_blk * tc                  # global timestep offset of this chunk

    h = h_ref[...]
    c = c_ref[...]

    # fully unrolled recurrence over the chunk (LLO gets full visibility)
    for i in range(tc):
        gates = gx[i] + jnp.dot(h, w_hh, preferred_element_type=jnp.float32)
        i_g = jax.nn.sigmoid(gates[:, 0 * Hp:1 * Hp])
        f_g = jax.nn.sigmoid(gates[:, 1 * Hp:2 * Hp])
        g_g = jnp.tanh(gates[:, 2 * Hp:3 * Hp])
        o_g = jax.nn.sigmoid(gates[:, 3 * Hp:4 * Hp])
        c_new = f_g * c + i_g * g_g
        h_new = o_g * jnp.tanh(c_new)
        valid = lens > (t0 + i)      # (tb, 1) bool, broadcasts over Hp lanes
        h = jnp.where(valid, h_new, h)
        c = jnp.where(valid, c_new, c)

    h_ref[...] = h
    c_ref[...] = c

    @pl.when(t_blk == n_t - 1)
    def _():
        # classifier head on the final hidden state (== ht[-1] of packed LSTM)
        out_ref[...] = (jnp.dot(h_ref[...], w_out_ref[...],
                                preferred_element_type=jnp.float32)
                        + b_out_ref[...])


def lstm_variable_input_forward(x, seq_lengths, params, hidden_dim, *, t_chunk=4):
    """x: (B, T, E) float; seq_lengths: (B,) int.  Returns (B, NUM_CLASSES)."""
    x = x.astype(jnp.float32)        # matches x_pack.to(torch.float32)
    B, T, E = x.shape
    H = hidden_dim

    # padded sizes: batch to sublane(8) / MXU tile, hidden & classes to 128 lanes
    if B <= 128:
        Bp = _round_up(B, 8)
        tb = Bp
    else:
        Bp = _round_up(B, 128)
        tb = 128
    Hp = _round_up(H, 128)
    NCp = _round_up(NUM_CLASSES, 128)
    Tp = _round_up(T, t_chunk)

    # (T, B, E) layout so the time axis is the leading (blocked) axis, then pad.
    x_tbe = jnp.transpose(x, (1, 0, 2))
    x_tbe = jnp.pad(x_tbe, ((0, Tp - T), (0, Bp - B), (0, 0)))
    lens = jnp.pad(seq_lengths.astype(jnp.int32), (0, Bp - B)).reshape(Bp, 1)

    # ---- weight prep: PyTorch (4H, K) gate-major -> (K, 4*Hp), zero-padded ----
    def pad_gates_in(w):             # w: (4H, K) -> (K, 4*Hp)
        K = w.shape[1]
        wg = w.reshape(4, H, K)
        wg = jnp.transpose(wg, (2, 0, 1))                     # (K, 4, H)
        wg = jnp.pad(wg, ((0, 0), (0, 0), (0, Hp - H)))
        return wg.reshape(K, 4 * Hp)

    w_ih_p = pad_gates_in(params["w_ih"])                                  # (E, 4Hp)
    w_hh_p = jnp.pad(pad_gates_in(params["w_hh"]), ((0, Hp - H), (0, 0)))  # (Hp, 4Hp)
    b_gate = (params["b_ih"] + params["b_hh"]).reshape(4, H)
    b_gate = jnp.pad(b_gate, ((0, 0), (0, Hp - H))).reshape(1, 4 * Hp)
    w_out_p = jnp.pad(params["w_out"].T,
                      ((0, Hp - H), (0, NCp - NUM_CLASSES)))               # (Hp, NCp)
    b_out_p = jnp.pad(params["b_out"], (0, NCp - NUM_CLASSES)).reshape(1, NCp)

    kernel = functools.partial(_lstm_kernel, hidden_pad=Hp)
    full2 = lambda shp: pl.BlockSpec(shp, lambda b, t: (0, 0))

    out_p = pl.pallas_call(
        kernel,
        out_shape=jax.ShapeDtypeStruct((Bp, NCp), jnp.float32),
        grid_spec=pltpu.PrefetchScalarGridSpec(
            num_scalar_prefetch=0,
            grid=(Bp // tb, Tp // t_chunk),
            in_specs=[
                pl.BlockSpec((t_chunk, tb, E), lambda b, t: (t, b, 0)),   # x chunk
                pl.BlockSpec((tb, 1), lambda b, t: (b, 0)),               # lengths
                full2((E, 4 * Hp)),                                       # W_ih^T
                full2((Hp, 4 * Hp)),                                      # W_hh^T
                full2((1, 4 * Hp)),                                       # bias
                full2((Hp, NCp)),                                         # W_out^T
                full2((1, NCp)),                                          # b_out
            ],
            out_specs=pl.BlockSpec((tb, NCp), lambda b, t: (b, 0)),
            scratch_shapes=[pltpu.VMEM((tb, Hp), jnp.float32),            # h
                            pltpu.VMEM((tb, Hp), jnp.float32)],           # c
        ),
        compiler_params=pltpu.CompilerParams(
            dimension_semantics=("parallel", "arbitrary"),
            vmem_limit_bytes=32 << 20,
        ),
    )(x_tbe, lens, w_ih_p, w_hh_p, b_gate, w_out_p, b_out_p)

    return out_p[:B, :NUM_CLASSES]


def init_params(key, embedding_dim, hidden_dim):
    # Deterministic synthetic init, PyTorch nn.LSTM weight shapes (gate order i,f,g,o).
    k = jax.random.split(key, 6)
    s = 1.0 / jnp.sqrt(hidden_dim)
    return {
        "w_ih": jax.random.uniform(k[0], (4 * hidden_dim, embedding_dim),
                                   jnp.float32, -s, s),
        "w_hh": jax.random.uniform(k[1], (4 * hidden_dim, hidden_dim),
                                   jnp.float32, -s, s),
        "b_ih": jax.random.uniform(k[2], (4 * hidden_dim,), jnp.float32, -s, s),
        "b_hh": jax.random.uniform(k[3], (4 * hidden_dim,), jnp.float32, -s, s),
        "w_out": jax.random.uniform(k[4], (NUM_CLASSES, hidden_dim),
                                    jnp.float32, -s, s),
        "b_out": jax.random.uniform(k[5], (NUM_CLASSES,), jnp.float32, -s, s),
    }


def _reference_forward(x, seq_lengths, params, hidden_dim):
    """Pure-JAX reference of pack_padded_sequence -> LSTM -> ht[-1] -> Linear."""
    x = x.astype(jnp.float32)
    B, T, E = x.shape
    H = hidden_dim
    hp = lax.Precision.HIGHEST
    w_ih_t = params["w_ih"].T
    w_hh_t = params["w_hh"].T
    b = (params["b_ih"] + params["b_hh"])[None, :]
    h = jnp.zeros((B, H), jnp.float32)
    c = jnp.zeros((B, H), jnp.float32)
    for t in range(T):
        g = (jnp.dot(x[:, t, :], w_ih_t, precision=hp)
             + jnp.dot(h, w_hh_t, precision=hp) + b)
        i = jax.nn.sigmoid(g[:, 0 * H:1 * H])
        f = jax.nn.sigmoid(g[:, 1 * H:2 * H])
        gg = jnp.tanh(g[:, 2 * H:3 * H])
        o = jax.nn.sigmoid(g[:, 3 * H:4 * H])
        c_new = f * c + i * gg
        h_new = o * jnp.tanh(c_new)
        valid = (seq_lengths > t)[:, None]
        h = jnp.where(valid, h_new, h)
        c = jnp.where(valid, c_new, c)
    return jnp.dot(h, params["w_out"].T, precision=hp) + params["b_out"][None, :]


if __name__ == "__main__":
    B, T, E, H = 2, 8, 16, 32
    key = jax.random.PRNGKey(0)
    kx, kp = jax.random.split(key)

    x = jax.random.normal(kx, (B, T, E), jnp.float32)
    seq_lengths = jnp.array([8, 5], jnp.int32)   # variable lengths (padded input)
    params = init_params(kp, E, H)

    out = lstm_variable_input_forward(x, seq_lengths, params, H, t_chunk=4)
    jax.block_until_ready(out)
    assert out.shape == (B, NUM_CLASSES)

    ref = _reference_forward(x, seq_lengths, params, H)
    assert jnp.allclose(out, ref, atol=2e-3, rtol=2e-3)

    print("KERNEL_OK")
</pallas_src>

<mosaic_0001>
module attributes {stable_mosaic.version = 11 : i64} {
  func.func @_lstm_kernel(%arg0: i32, %arg1: i32, %arg2: memref<4x8x16xf32, #tpu.memory_space<vmem>>, %arg3: memref<8x1xi32, #tpu.memory_space<vmem>>, %arg4: memref<16x512xf32, #tpu.memory_space<vmem>>, %arg5: memref<128x512xf32, #tpu.memory_space<vmem>>, %arg6: memref<1x512xf32, #tpu.memory_space<vmem>>, %arg7: memref<128x128xf32, #tpu.memory_space<vmem>>, %arg8: memref<1x128xf32, #tpu.memory_space<vmem>>, %arg9: memref<8x128xf32, #tpu.memory_space<vmem>>, %arg10: memref<8x128xf32, #tpu.memory_space<vmem>>, %arg11: memref<8x128xf32, #tpu.memory_space<vmem>>) attributes {dimension_semantics = [#tpu.dimension_semantics<parallel>, #tpu.dimension_semantics<arbitrary>], iteration_bounds = array<i64: 1, 2>, scalar_prefetch = 0 : i64, scratch_operands = 2 : i64, tpu.core_type = #tpu.core_type<tc>, window_params = [{transform_indices = @transform_0, window_bounds = array<i64: 4, 8, 16>}, {transform_indices = @transform_1, window_bounds = array<i64: 8, 1>}, {pipeline_mode = #tpu.pipeline_mode<synchronous>, transform_indices = @transform_2, window_bounds = array<i64: 16, 512>}, {pipeline_mode = #tpu.pipeline_mode<synchronous>, transform_indices = @transform_3, window_bounds = array<i64: 128, 512>}, {pipeline_mode = #tpu.pipeline_mode<synchronous>, transform_indices = @transform_4, window_bounds = array<i64: 1, 512>}, {pipeline_mode = #tpu.pipeline_mode<synchronous>, transform_indices = @transform_5, window_bounds = array<i64: 128, 128>}, {pipeline_mode = #tpu.pipeline_mode<synchronous>, transform_indices = @transform_6, window_bounds = array<i64: 1, 128>}, {transform_indices = @transform_7, window_bounds = array<i64: 8, 128>}]} {
    %c0_i32 = arith.constant 0 : i32
    %0 = arith.cmpi eq, %arg1, %c0_i32 : i32
    %1 = arith.extui %0 : i1 to i32
    %c0_i32_0 = arith.constant 0 : i32
    %2 = arith.cmpi ne, %1, %c0_i32_0 : i32
    scf.if %2 {
      %cst_38 = arith.constant 0.000000e+00 : f32
      %173 = vector.broadcast %cst_38 : f32 to vector<8x128xf32>
      %c0_39 = arith.constant 0 : index
      %c0_40 = arith.constant 0 : index
      %174 = vector.load %arg10[%c0_39, %c0_40] : memref<8x128xf32, #tpu.memory_space<vmem>>, vector<8x128xf32>
      tpu.vector_store %arg10[%c0_39, %c0_40], %173 {strides = array<i32>} : memref<8x128xf32, #tpu.memory_space<vmem>>, vector<8x128xf32>,
      %cst_41 = arith.constant 0.000000e+00 : f32
      %175 = vector.broadcast %cst_41 : f32 to vector<8x128xf32>
      %c0_42 = arith.constant 0 : index
      %c0_43 = arith.constant 0 : index
      %176 = vector.load %arg11[%c0_42, %c0_43] : memref<8x128xf32, #tpu.memory_space<vmem>>, vector<8x128xf32>
      tpu.vector_store %arg11[%c0_42, %c0_43], %175 {strides = array<i32>} : memref<8x128xf32, #tpu.memory_space<vmem>>, vector<8x128xf32>,
    } else {
    }
    %c0 = arith.constant 0 : index
    %c0_1 = arith.constant 0 : index
    %c0_2 = arith.constant 0 : index
    %3 = vector.load %arg2[%c0, %c0_1, %c0_2] : memref<4x8x16xf32, #tpu.memory_space<vmem>>, vector<4x8x16xf32>
    %4 = vector.shape_cast %3 : vector<4x8x16xf32> to vector<32x16xf32>
    %c0_3 = arith.constant 0 : index
    %c0_4 = arith.constant 0 : index
    %5 = vector.load %arg4[%c0_3, %c0_4] : memref<16x512xf32, #tpu.memory_space<vmem>>, vector<16x512xf32>
    %cst = arith.constant dense<0.000000e+00> : vector<32x512xf32>
    %6 = tpu.matmul %4, %5, %cst {dimension_numbers = #tpu.dot_dimension_numbers<[1], [0], [0], [1], [0, 0, 1, 1], [], []>} : vector<32x16xf32>, vector<16x512xf32>, vector<32x512xf32> -> vector<32x512xf32>
    %c0_5 = arith.constant 0 : index
    %c0_6 = arith.constant 0 : index
    %7 = vector.load %arg6[%c0_5, %c0_6] : memref<1x512xf32, #tpu.memory_space<vmem>>, vector<1x512xf32>
    %8 = vector.broadcast %7 : vector<1x512xf32> to vector<32x512xf32>
    %9 = arith.addf %6, %8 : vector<32x512xf32>
    %10 = vector.shape_cast %9 : vector<32x512xf32> to vector<4x8x512xf32>
    %c0_7 = arith.constant 0 : index
    %c0_8 = arith.constant 0 : index
    %11 = vector.load %arg3[%c0_7, %c0_8] : memref<8x1xi32, #tpu.memory_space<vmem>>, vector<8x1xi32>
    %c0_9 = arith.constant 0 : index
    %c0_10 = arith.constant 0 : index
    %12 = vector.load %arg5[%c0_9, %c0_10] : memref<128x512xf32, #tpu.memory_space<vmem>>, vector<128x512xf32>
    %c4_i32 = arith.constant 4 : i32
    %13 = arith.muli %arg1, %c4_i32 : i32
    %c0_11 = arith.constant 0 : index
    %c0_12 = arith.constant 0 : index
    %14 = vector.load %arg10[%c0_11, %c0_12] : memref<8x128xf32, #tpu.memory_space<vmem>>, vector<8x128xf32>
    %c0_13 = arith.constant 0 : index
    %c0_14 = arith.constant 0 : index
    %15 = vector.load %arg11[%c0_13, %c0_14] : memref<8x128xf32, #tpu.memory_space<vmem>>, vector<8x128xf32>
    %16 = vector.extract_strided_slice %10 {offsets = [0, 0, 0], sizes = [1, 8, 512], strides = [1, 1, 1]} : vector<4x8x512xf32> to vector<1x8x512xf32>
    %17 = vector.shape_cast %16 : vector<1x8x512xf32> to vector<8x512xf32>
    %cst_15 = arith.constant dense<0.000000e+00> : vector<8x512xf32>
    %18 = tpu.matmul %14, %12, %cst_15 {dimension_numbers = #tpu.dot_dimension_numbers<[1], [0], [0], [1], [0, 0, 1, 1], [], []>} : vector<8x128xf32>, vector<128x512xf32>, vector<8x512xf32> -> vector<8x512xf32>
    %19 = arith.addf %17, %18 : vector<8x512xf32>
    %20 = vector.extract_strided_slice %19 {offsets = [0, 0], sizes = [8, 128], strides = [1, 1]} : vector<8x512xf32> to vector<8x128xf32>
    %21 = arith.negf %20 : vector<8x128xf32>
    %22 = math.exp %21 : vector<8x128xf32>
    %cst_16 = arith.constant 1.000000e+00 : f32
    %23 = vector.broadcast %cst_16 : f32 to vector<8x128xf32>
    %24 = arith.addf %23, %22 : vector<8x128xf32>
    %25 = arith.divf %23, %24 : vector<8x128xf32>
    %26 = vector.extract_strided_slice %19 {offsets = [0, 128], sizes = [8, 128], strides = [1, 1]} : vector<8x512xf32> to vector<8x128xf32>
    %27 = arith.negf %26 : vector<8x128xf32>
    %28 = math.exp %27 : vector<8x128xf32>
    %cst_17 = arith.constant 1.000000e+00 : f32
    %29 = vector.broadcast %cst_17 : f32 to vector<8x128xf32>
    %30 = arith.addf %29, %28 : vector<8x128xf32>
    %31 = arith.divf %29, %30 : vector<8x128xf32>
    %32 = vector.extract_strided_slice %19 {offsets = [0, 256], sizes = [8, 128], strides = [1, 1]} : vector<8x512xf32> to vector<8x128xf32>
    %33 = math.tanh %32 : vector<8x128xf32>
    %34 = vector.extract_strided_slice %19 {offsets = [0, 384], sizes = [8, 128], strides = [1, 1]} : vector<8x512xf32> to vector<8x128xf32>
    %35 = arith.negf %34 : vector<8x128xf32>
    %36 = math.exp %35 : vector<8x128xf32>
    %cst_18 = arith.constant 1.000000e+00 : f32
    %37 = vector.broadcast %cst_18 : f32 to vector<8x128xf32>
    %38 = arith.addf %37, %36 : vector<8x128xf32>
    %39 = arith.divf %37, %38 : vector<8x128xf32>
    %40 = arith.mulf %31, %15 : vector<8x128xf32>
    %41 = arith.mulf %25, %33 : vector<8x128xf32>
    %42 = arith.addf %40, %41 : vector<8x128xf32>
    %43 = math.tanh %42 : vector<8x128xf32>
    %44 = arith.mulf %39, %43 : vector<8x128xf32>
    %c0_i32_19 = arith.constant 0 : i32
    %45 = arith.addi %13, %c0_i32_19 : i32
    %46 = vector.broadcast %45 : i32 to vector<8x1xi32>
    %47 = arith.cmpi sgt, %11, %46 : vector<8x1xi32>
    %48 = vector.shape_cast %47 : vector<8x1xi1> to vector<8x1xi1>
    %49 = vector.broadcast %48 : vector<8x1xi1> to vector<8x128xi1>
    %50 = arith.select %49, %44, %14 : vector<8x128xi1>, vector<8x128xf32>
    %51 = vector.shape_cast %47 : vector<8x1xi1> to vector<8x1xi1>
    %52 = vector.broadcast %51 : vector<8x1xi1> to vector<8x128xi1>
    %53 = arith.select %52, %42, %15 : vector<8x128xi1>, vector<8x128xf32>
    %54 = vector.extract_strided_slice %10 {offsets = [1, 0, 0], sizes = [1, 8, 512], strides = [1, 1, 1]} : vector<4x8x512xf32> to vector<1x8x512xf32>
    %55 = vector.shape_cast %54 : vector<1x8x512xf32> to vector<8x512xf32>
    %cst_20 = arith.constant dense<0.000000e+00> : vector<8x512xf32>
    %56 = tpu.matmul %50, %12, %cst_20 {dimension_numbers = #tpu.dot_dimension_numbers<[1], [0], [0], [1], [0, 0, 1, 1], [], []>} : vector<8x128xf32>, vector<128x512xf32>, vector<8x512xf32> -> vector<8x512xf32>
    %57 = arith.addf %55, %56 : vector<8x512xf32>
    %58 = vector.extract_strided_slice %57 {offsets = [0, 0], sizes = [8, 128], strides = [1, 1]} : vector<8x512xf32> to vector<8x128xf32>
    %59 = arith.negf %58 : vector<8x128xf32>
    %60 = math.exp %59 : vector<8x128xf32>
    %cst_21 = arith.constant 1.000000e+00 : f32
    %61 = vector.broadcast %cst_21 : f32 to vector<8x128xf32>
    %62 = arith.addf %61, %60 : vector<8x128xf32>
    %63 = arith.divf %61, %62 : vector<8x128xf32>
    %64 = vector.extract_strided_slice %57 {offsets = [0, 128], sizes = [8, 128], strides = [1, 1]} : vector<8x512xf32> to vector<8x128xf32>
    %65 = arith.negf %64 : vector<8x128xf32>
    %66 = math.exp %65 : vector<8x128xf32>
    %cst_22 = arith.constant 1.000000e+00 : f32
    %67 = vector.broadcast %cst_22 : f32 to vector<8x128xf32>
    %68 = arith.addf %67, %66 : vector<8x128xf32>
    %69 = arith.divf %67, %68 : vector<8x128xf32>
    %70 = vector.extract_strided_slice %57 {offsets = [0, 256], sizes = [8, 128], strides = [1, 1]} : vector<8x512xf32> to vector<8x128xf32>
    %71 = math.tanh %70 : vector<8x128xf32>
    %72 = vector.extract_strided_slice %57 {offsets = [0, 384], sizes = [8, 128], strides = [1, 1]} : vector<8x512xf32> to vector<8x128xf32>
    %73 = arith.negf %72 : vector<8x128xf32>
    %74 = math.exp %73 : vector<8x128xf32>
    %cst_23 = arith.constant 1.000000e+00 : f32
    %75 = vector.broadcast %cst_23 : f32 to vector<8x128xf32>
    %76 = arith.addf %75, %74 : vector<8x128xf32>
    %77 = arith.divf %75, %76 : vector<8x128xf32>
    %78 = arith.mulf %69, %53 : vector<8x128xf32>
    %79 = arith.mulf %63, %71 : vector<8x128xf32>
    %80 = arith.addf %78, %79 : vector<8x128xf32>
    %81 = math.tanh %80 : vector<8x128xf32>
    %82 = arith.mulf %77, %81 : vector<8x128xf32>
    %c1_i32 = arith.constant 1 : i32
    %83 = arith.addi %13, %c1_i32 : i32
    %84 = vector.broadcast %83 : i32 to vector<8x1xi32>
    %85 = arith.cmpi sgt, %11, %84 : vector<8x1xi32>
    %86 = vector.shape_cast %85 : vector<8x1xi1> to vector<8x1xi1>
    %87 = vector.broadcast %86 : vector<8x1xi1> to vector<8x128xi1>
    %88 = arith.select %87, %82, %50 : vector<8x128xi1>, vector<8x128xf32>
    %89 = vector.shape_cast %85 : vector<8x1xi1> to vector<8x1xi1>
    %90 = vector.broadcast %89 : vector<8x1xi1> to vector<8x128xi1>
    %91 = arith.select %90, %80, %53 : vector<8x128xi1>, vector<8x128xf32>
    %92 = vector.extract_strided_slice %10 {offsets = [2, 0, 0], sizes = [1, 8, 512], strides = [1, 1, 1]} : vector<4x8x512xf32> to vector<1x8x512xf32>
    %93 = vector.shape_cast %92 : vector<1x8x512xf32> to vector<8x512xf32>
    %cst_24 = arith.constant dense<0.000000e+00> : vector<8x512xf32>
    %94 = tpu.matmul %88, %12, %cst_24 {dimension_numbers = #tpu.dot_dimension_numbers<[1], [0], [0], [1], [0, 0, 1, 1], [], []>} : vector<8x128xf32>, vector<128x512xf32>, vector<8x512xf32> -> vector<8x512xf32>
    %95 = arith.addf %93, %94 : vector<8x512xf32>
    %96 = vector.extract_strided_slice %95 {offsets = [0, 0], sizes = [8, 128], strides = [1, 1]} : vector<8x512xf32> to vector<8x128xf32>
    %97 = arith.negf %96 : vector<8x128xf32>
    %98 = math.exp %97 : vector<8x128xf32>
    %cst_25 = arith.constant 1.000000e+00 : f32
    %99 = vector.broadcast %cst_25 : f32 to vector<8x128xf32>
    %100 = arith.addf %99, %98 : vector<8x128xf32>
    %101 = arith.divf %99, %100 : vector<8x128xf32>
    %102 = vector.extract_strided_slice %95 {offsets = [0, 128], sizes = [8, 128], strides = [1, 1]} : vector<8x512xf32> to vector<8x128xf32>
    %103 = arith.negf %102 : vector<8x128xf32>
    %104 = math.exp %103 : vector<8x128xf32>
    %cst_26 = arith.constant 1.000000e+00 : f32
    %105 = vector.broadcast %cst_26 : f32 to vector<8x128xf32>
    %106 = arith.addf %105, %104 : vector<8x128xf32>
    %107 = arith.divf %105, %106 : vector<8x128xf32>
    %108 = vector.extract_strided_slice %95 {offsets = [0, 256], sizes = [8, 128], strides = [1, 1]} : vector<8x512xf32> to vector<8x128xf32>
    %109 = math.tanh %108 : vector<8x128xf32>
    %110 = vector.extract_strided_slice %95 {offsets = [0, 384], sizes = [8, 128], strides = [1, 1]} : vector<8x512xf32> to vector<8x128xf32>
    %111 = arith.negf %110 : vector<8x128xf32>
    %112 = math.exp %111 : vector<8x128xf32>
    %cst_27 = arith.constant 1.000000e+00 : f32
    %113 = vector.broadcast %cst_27 : f32 to vector<8x128xf32>
    %114 = arith.addf %113, %112 : vector<8x128xf32>
    %115 = arith.divf %113, %114 : vector<8x128xf32>
    %116 = arith.mulf %107, %91 : vector<8x128xf32>
    %117 = arith.mulf %101, %109 : vector<8x128xf32>
    %118 = arith.addf %116, %117 : vector<8x128xf32>
    %119 = math.tanh %118 : vector<8x128xf32>
    %120 = arith.mulf %115, %119 : vector<8x128xf32>
    %c2_i32 = arith.constant 2 : i32
    %121 = arith.addi %13, %c2_i32 : i32
    %122 = vector.broadcast %121 : i32 to vector<8x1xi32>
    %123 = arith.cmpi sgt, %11, %122 : vector<8x1xi32>
    %124 = vector.shape_cast %123 : vector<8x1xi1> to vector<8x1xi1>
    %125 = vector.broadcast %124 : vector<8x1xi1> to vector<8x128xi1>
    %126 = arith.select %125, %120, %88 : vector<8x128xi1>, vector<8x128xf32>
    %127 = vector.shape_cast %123 : vector<8x1xi1> to vector<8x1xi1>
    %128 = vector.broadcast %127 : vector<8x1xi1> to vector<8x128xi1>
    %129 = arith.select %128, %118, %91 : vector<8x128xi1>, vector<8x128xf32>
    %130 = vector.extract_strided_slice %10 {offsets = [3, 0, 0], sizes = [1, 8, 512], strides = [1, 1, 1]} : vector<4x8x512xf32> to vector<1x8x512xf32>
    %131 = vector.shape_cast %130 : vector<1x8x512xf32> to vector<8x512xf32>
    %cst_28 = arith.constant dense<0.000000e+00> : vector<8x512xf32>
    %132 = tpu.matmul %126, %12, %cst_28 {dimension_numbers = #tpu.dot_dimension_numbers<[1], [0], [0], [1], [0, 0, 1, 1], [], []>} : vector<8x128xf32>, vector<128x512xf32>, vector<8x512xf32> -> vector<8x512xf32>
    %133 = arith.addf %131, %132 : vector<8x512xf32>
    %134 = vector.extract_strided_slice %133 {offsets = [0, 0], sizes = [8, 128], strides = [1, 1]} : vector<8x512xf32> to vector<8x128xf32>
    %135 = arith.negf %134 : vector<8x128xf32>
    %136 = math.exp %135 : vector<8x128xf32>
    %cst_29 = arith.constant 1.000000e+00 : f32
    %137 = vector.broadcast %cst_29 : f32 to vector<8x128xf32>
    %138 = arith.addf %137, %136 : vector<8x128xf32>
    %139 = arith.divf %137, %138 : vector<8x128xf32>
    %140 = vector.extract_strided_slice %133 {offsets = [0, 128], sizes = [8, 128], strides = [1, 1]} : vector<8x512xf32> to vector<8x128xf32>
    %141 = arith.negf %140 : vector<8x128xf32>
    %142 = math.exp %141 : vector<8x128xf32>
    %cst_30 = arith.constant 1.000000e+00 : f32
    %143 = vector.broadcast %cst_30 : f32 to vector<8x128xf32>
    %144 = arith.addf %143, %142 : vector<8x128xf32>
    %145 = arith.divf %143, %144 : vector<8x128xf32>
    %146 = vector.extract_strided_slice %133 {offsets = [0, 256], sizes = [8, 128], strides = [1, 1]} : vector<8x512xf32> to vector<8x128xf32>
    %147 = math.tanh %146 : vector<8x128xf32>
    %148 = vector.extract_strided_slice %133 {offsets = [0, 384], sizes = [8, 128], strides = [1, 1]} : vector<8x512xf32> to vector<8x128xf32>
    %149 = arith.negf %148 : vector<8x128xf32>
    %150 = math.exp %149 : vector<8x128xf32>
    %cst_31 = arith.constant 1.000000e+00 : f32
    %151 = vector.broadcast %cst_31 : f32 to vector<8x128xf32>
    %152 = arith.addf %151, %150 : vector<8x128xf32>
    %153 = arith.divf %151, %152 : vector<8x128xf32>
    %154 = arith.mulf %145, %129 : vector<8x128xf32>
    %155 = arith.mulf %139, %147 : vector<8x128xf32>
    %156 = arith.addf %154, %155 : vector<8x128xf32>
    %157 = math.tanh %156 : vector<8x128xf32>
    %158 = arith.mulf %153, %157 : vector<8x128xf32>
    %c3_i32 = arith.constant 3 : i32
    %159 = arith.addi %13, %c3_i32 : i32
    %160 = vector.broadcast %159 : i32 to vector<8x1xi32>
    %161 = arith.cmpi sgt, %11, %160 : vector<8x1xi32>
    %162 = vector.shape_cast %161 : vector<8x1xi1> to vector<8x1xi1>
    %163 = vector.broadcast %162 : vector<8x1xi1> to vector<8x128xi1>
    %164 = arith.select %163, %158, %126 : vector<8x128xi1>, vector<8x128xf32>
    %165 = vector.shape_cast %161 : vector<8x1xi1> to vector<8x1xi1>
    %166 = vector.broadcast %165 : vector<8x1xi1> to vector<8x128xi1>
    %167 = arith.select %166, %156, %129 : vector<8x128xi1>, vector<8x128xf32>
    %c0_32 = arith.constant 0 : index
    %c0_33 = arith.constant 0 : index
    %168 = vector.load %arg10[%c0_32, %c0_33] : memref<8x128xf32, #tpu.memory_space<vmem>>, vector<8x128xf32>
    tpu.vector_store %arg10[%c0_32, %c0_33], %164 {strides = array<i32>} : memref<8x128xf32, #tpu.memory_space<vmem>>, vector<8x128xf32>,
    %c0_34 = arith.constant 0 : index
    %c0_35 = arith.constant 0 : index
    %169 = vector.load %arg11[%c0_34, %c0_35] : memref<8x128xf32, #tpu.memory_space<vmem>>, vector<8x128xf32>
    tpu.vector_store %arg11[%c0_34, %c0_35], %167 {strides = array<i32>} : memref<8x128xf32, #tpu.memory_space<vmem>>, vector<8x128xf32>,
    %c1_i32_36 = arith.constant 1 : i32
    %170 = arith.cmpi eq, %arg1, %c1_i32_36 : i32
    %171 = arith.extui %170 : i1 to i32
    %c0_i32_37 = arith.constant 0 : i32
    %172 = arith.cmpi ne, %171, %c0_i32_37 : i32
    scf.if %172 {
      %c0_38 = arith.constant 0 : index
      %c0_39 = arith.constant 0 : index
      %173 = vector.load %arg10[%c0_38, %c0_39] : memref<8x128xf32, #tpu.memory_space<vmem>>, vector<8x128xf32>
      %c0_40 = arith.constant 0 : index
      %c0_41 = arith.constant 0 : index
      %174 = vector.load %arg7[%c0_40, %c0_41] : memref<128x128xf32, #tpu.memory_space<vmem>>, vector<128x128xf32>
      %cst_42 = arith.constant dense<0.000000e+00> : vector<8x128xf32>
      %175 = tpu.matmul %173, %174, %cst_42 {dimension_numbers = #tpu.dot_dimension_numbers<[1], [0], [0], [1], [0, 0, 1, 1], [], []>} : vector<8x128xf32>, vector<128x128xf32>, vector<8x128xf32> -> vector<8x128xf32>
      %c0_43 = arith.constant 0 : index
      %c0_44 = arith.constant 0 : index
      %176 = vector.load %arg8[%c0_43, %c0_44] : memref<1x128xf32, #tpu.memory_space<vmem>>, vector<1x128xf32>
      %177 = vector.broadcast %176 : vector<1x128xf32> to vector<8x128xf32>
      %178 = arith.addf %175, %177 : vector<8x128xf32>
      %c0_45 = arith.constant 0 : index
      %c0_46 = arith.constant 0 : index
      %179 = vector.load %arg9[%c0_45, %c0_46] : memref<8x128xf32, #tpu.memory_space<vmem>>, vector<8x128xf32>
      tpu.vector_store %arg9[%c0_45, %c0_46], %178 {strides = array<i32>} : memref<8x128xf32, #tpu.memory_space<vmem>>, vector<8x128xf32>,
    } else {
    }
    return
  }
  func.func @transform_0(%arg0: i32, %arg1: i32) -> (i32, i32, i32) {
    %c0_i32 = arith.constant 0 : i32
    %c0_i32_0 = arith.constant 0 : i32
    return %arg1, %arg0, %c0_i32 : i32, i32, i32
  }
  func.func @transform_1(%arg0: i32, %arg1: i32) -> (i32, i32) {
    %c0_i32 = arith.constant 0 : i32
    %c0_i32_0 = arith.constant 0 : i32
    return %arg0, %c0_i32 : i32, i32
  }
  func.func @transform_2(%arg0: i32, %arg1: i32) -> (i32, i32) {
    %c0_i32 = arith.constant 0 : i32
    %c0_i32_0 = arith.constant 0 : i32
    %c0_i32_1 = arith.constant 0 : i32
    return %c0_i32, %c0_i32_0 : i32, i32
  }
  func.func @transform_3(%arg0: i32, %arg1: i32) -> (i32, i32) {
    %c0_i32 = arith.constant 0 : i32
    %c0_i32_0 = arith.constant 0 : i32
    %c0_i32_1 = arith.constant 0 : i32
    return %c0_i32, %c0_i32_0 : i32, i32
  }
  func.func @transform_4(%arg0: i32, %arg1: i32) -> (i32, i32) {
    %c0_i32 = arith.constant 0 : i32
    %c0_i32_0 = arith.constant 0 : i32
    %c0_i32_1 = arith.constant 0 : i32
    return %c0_i32, %c0_i32_0 : i32, i32
  }
  func.func @transform_5(%arg0: i32, %arg1: i32) -> (i32, i32) {
    %c0_i32 = arith.constant 0 : i32
    %c0_i32_0 = arith.constant 0 : i32
    %c0_i32_1 = arith.constant 0 : i32
    return %c0_i32, %c0_i32_0 : i32, i32
  }
  func.func @transform_6(%arg0: i32, %arg1: i32) -> (i32, i32) {
    %c0_i32 = arith.constant 0 : i32
    %c0_i32_0 = arith.constant 0 : i32
    %c0_i32_1 = arith.constant 0 : i32
    return %c0_i32, %c0_i32_0 : i32, i32
  }
  func.func @transform_7(%arg0: i32, %arg1: i32) -> (i32, i32) {
    %c0_i32 = arith.constant 0 : i32
    %c0_i32_0 = arith.constant 0 : i32
    return %arg0, %c0_i32 : i32, i32
  }
}

</mosaic_0001>

<llo_original>
// kernel: tpu_custom_call.1
$region0: #{tpu_custom_call.1}
  #allocation0 [shape = 'u32[]', space=smem, size = 0x4, offset = 0x4, fixed_abs, tag = 'smem constant byte address 0x4 - core index']
  #allocation1 [shape = 'u32[72,128]{1,0:T(1,128)}', space=vmem, size = 0x9000, scoped, tag = 'internal scratch']
  #allocation2 [shape = 'f32[8,128]{1,0:T(8,128)}', space=vmem, size = 0x1000, scoped, tag = 'scratch operand']
  #allocation3 [shape = 'f32[8,128]{1,0:T(8,128)}', space=vmem, size = 0x1000, scoped, tag = 'scratch operand']
  %s0 = inlined_call_operand.hbm [shape: f32[8,8,16], index: 0, kind: input, shape index: {}]
  %s1 = inlined_call_operand.vmem [shape: s32[8,1], index: 1, kind: input, shape index: {}]
  %s2 = inlined_call_operand.hbm [shape: f32[16,512], index: 2, kind: input, shape index: {}]
  %s3 = inlined_call_operand.hbm [shape: f32[128,512], index: 3, kind: input, shape index: {}]
  %s4 = inlined_call_operand.vmem [shape: f32[1,512], index: 4, kind: input, shape index: {}]
  %s5 = inlined_call_operand.hbm [shape: f32[128,128], index: 5, kind: input, shape index: {}]
  %s6 = inlined_call_operand.vmem [shape: f32[1,128], index: 6, kind: input, shape index: {}]
  %s7 = inlined_call_operand.hbm [shape: f32[8,128], index: 7, kind: output, shape index: {}]
  %s8 = sld [smem:[#allocation0]]
  $region85: #{tpu_custom_call.1} parent=0
    _
  %s10 = ssub.s32 1, %s8
  %s11 = scalar_select 0, %s10, %s8
  $region1: #{tpu_custom_call.1} parent=0
    #allocation4 [shape = 'u8[32768]{0}', space=vmem, size = 0x8000, scoped, tag = 'input window, operand 0']
    #allocation5 [shape = 's32[2]{0}', space=sflag, size = 0x8, scoped, tag = 'scoped memory for tpu_custom_call.1']
    #allocation6 [shape = 's32[2]{0}', space=sflag, size = 0x8, scoped, tag = 'scoped memory for tpu_custom_call.1']
    #allocation7 [shape = 'u8[32768]{0}', space=vmem, size = 0x8000, scoped, tag = 'input window, operand 2, single buffered']
    #allocation8 [shape = 's32[1]{0}', space=sflag, size = 0x4, scoped, tag = 'scoped memory for tpu_custom_call.1']
    #allocation9 [shape = 'u8[262144]{0}', space=vmem, size = 0x40000, scoped, tag = 'input window, operand 3, single buffered']
    #allocation10 [shape = 'u8[65536]{0}', space=vmem, size = 0x10000, scoped, tag = 'input window, operand 5, single buffered']
    #allocation11 [shape = 's32[1]{0}', space=sflag, size = 0x4, scoped, tag = 'scoped memory for tpu_custom_call.1']
    #allocation12 [shape = 'u8[4096]{0}', space=vmem, size = 0x1000, scoped, tag = 'output window, operand 0, single buffered']
    %12 = vsyncpa [#allocation5], 0
    %s13 = scalar_lea.sflag [#allocation5], 1
    %14 = vsyncpa %s13, 0
    %15 = vsyncpa [#allocation8], 0
    %16 = vsyncpa [#allocation11], 0
    %17 = vsyncpa [#allocation6], 0
    loop: start=0, step=1, limit=4
    $region2: #{tpu_custom_call.1} parent=1 // loop_pre_header
      _
    $region3: #{tpu_custom_call.1} parent=1 // loop_header
      %s19 = sphi 0, %s23
      %p20 = scmp.ge.s32.totalorder %s19, 4
      %s26 = sphi 0, %s38
      %s27 = sphi 0, %s34
      %s28 = sphi 0, %s26
      %s29 = sphi 0, %s27
      %s30 = sphi 0, %s28
      %s31 = sphi 0, %s29
      %s43 = sphi 0, %s45
      %s46 = sphi 0, %s43
      %s47 = sphi 0, %s46
      %s63 = sphi 0, %s47
      %s69 = sphi 0, %s71
      %s72 = sphi 0, %s69
      %s73 = sphi 0, %s72
      %s89 = sphi 0, %s73
      %s93 = sphi 0, %s93
      %s95 = sphi 0, %s93
      %s96 = sphi 0, %s95
      %s110 = sphi 0, %s96
      %s114 = sphi 0, %s114
      %s116 = sphi 0, %s114
      %s117 = sphi 0, %s116
      %s131 = sphi 0, %s117
      %s135 = sphi 0, %s135
      %s137 = sphi 0, %s135
      %s138 = sphi 0, %s137
      %s152 = sphi 0, %s138
      %s156 = sphi 0, %s156
      %s158 = sphi 0, %s156
      %s159 = sphi 0, %s158
      %s173 = sphi 0, %s159
      %s177 = sphi 0, %s177
      %s179 = sphi 0, %s177
      %s180 = sphi 0, %s179
      %s194 = sphi 0, %s180
      %s200 = sphi 0, %s202
      %s203 = sphi 0, %s200
      %s204 = sphi 0, %s203
      %s220 = sphi 0, %s204
    $region4: #{tpu_custom_call.1} parent=1 // loop_header_branch
      %22 = sbr.rel (%p20) target = $region8
    $region5: #{tpu_custom_call.1} parent=1 // loop_body
      %s24 = ssub.s32 %s19, 1
      %s25 = ssub.s32 %s19, 2
      %s32 = sadd.s32 1, %s27
      %p33 = scmp.ge.s32.totalorder %s32, 2
      %s34 = scalar_select %p33, 0, %s32
      %s35 = sadd.s32 1, %s26
      %s36 = scalar_select %p33, %s35, %s26
      %p37 = scmp.ge.s32.totalorder %s36, 1
      %s38 = scalar_select %p37, 0, %s36
      %s39 = ssub.s32 %s27, %s34
      %s40 = ssub.s32 %s26, %s38
      %s41 = sor.u32 %s39, %s40
      %p42 = scmp.eq.s32.totalorder %s41, 0
      %s44 = sadd.s32 %s43, 1
      %s45 = scalar_select %p42, %s43, %s44
      %p48 = pneg %p42
      %p49 = scmp.eq.s32.totalorder %s19, 1
      %p50 = por %p48, %p49
      %p51 = scmp.ne.s32.totalorder %s43, %s46
      %p52 = scmp.eq.s32.totalorder %s19, 0
      %p53 = por %p51, %p52
      %p54 = scmp.ne.s32.totalorder %s43, %s46
      %p55 = scmp.eq.s32.totalorder %s24, 1
      %p56 = por %p54, %p55
      %p57 = scmp.ne.s32.totalorder %s46, %s47
      %p58 = scmp.eq.s32.totalorder %s24, 0
      %p59 = por %p57, %p58
      %p60 = scmp.ne.s32.totalorder %s46, %s47
      %p61 = scmp.eq.s32.totalorder %s25, 1
      %p62 = por %p60, %p61
      %p64 = scmp.ne.s32.totalorder %s47, %s63
      %p65 = scmp.eq.s32.totalorder %s25, 0
      %p66 = por %p64, %p65
      %s67 = ssub.s32 %s26, %s38
      %p68 = scmp.eq.s32.totalorder %s67, 0
      %s70 = sadd.s32 %s69, 1
      %s71 = scalar_select %p68, %s69, %s70
      %p74 = pneg %p68
      %p75 = scmp.eq.s32.totalorder %s19, 1
      %p76 = por %p74, %p75
      %p77 = scmp.ne.s32.totalorder %s69, %s72
      %p78 = scmp.eq.s32.totalorder %s19, 0
      %p79 = por %p77, %p78
      %p80 = scmp.ne.s32.totalorder %s69, %s72
      %p81 = scmp.eq.s32.totalorder %s24, 1
      %p82 = por %p80, %p81
      %p83 = scmp.ne.s32.totalorder %s72, %s73
      %p84 = scmp.eq.s32.totalorder %s24, 0
      %p85 = por %p83, %p84
      %p86 = scmp.ne.s32.totalorder %s72, %s73
      %p87 = scmp.eq.s32.totalorder %s25, 1
      %p88 = por %p86, %p87
      %p90 = scmp.ne.s32.totalorder %s73, %s89
      %p91 = scmp.eq.s32.totalorder %s25, 0
      %p92 = por %p90, %p91
      %s94 = sadd.s32 %s93, 1
      %p97 = scmp.eq.s32.totalorder %s19, 1
      %p98 = scmp.ne.s32.totalorder %s93, %s95
      %p99 = scmp.eq.s32.totalorder %s19, 0
      %p100 = por %p98, %p99
      %p101 = scmp.ne.s32.totalorder %s93, %s95
      %p102 = scmp.eq.s32.totalorder %s24, 1
      %p103 = por %p101, %p102
      %p104 = scmp.ne.s32.totalorder %s95, %s96
      %p105 = scmp.eq.s32.totalorder %s24, 0
      %p106 = por %p104, %p105
      %p107 = scmp.ne.s32.totalorder %s95, %s96
      %p108 = scmp.eq.s32.totalorder %s25, 1
      %p109 = por %p107, %p108
      %p111 = scmp.ne.s32.totalorder %s96, %s110
      %p112 = scmp.eq.s32.totalorder %s25, 0
      %p113 = por %p111, %p112
      %s115 = sadd.s32 %s114, 1
      %p118 = scmp.eq.s32.totalorder %s19, 1
      %p119 = scmp.ne.s32.totalorder %s114, %s116
      %p120 = scmp.eq.s32.totalorder %s19, 0
      %p121 = por %p119, %p120
      %p122 = scmp.ne.s32.totalorder %s114, %s116
      %p123 = scmp.eq.s32.totalorder %s24, 1
      %p124 = por %p122, %p123
      %p125 = scmp.ne.s32.totalorder %s116, %s117
      %p126 = scmp.eq.s32.totalorder %s24, 0
      %p127 = por %p125, %p126
      %p128 = scmp.ne.s32.totalorder %s116, %s117
      %p129 = scmp.eq.s32.totalorder %s25, 1
      %p130 = por %p128, %p129
      %p132 = scmp.ne.s32.totalorder %s117, %s131
      %p133 = scmp.eq.s32.totalorder %s25, 0
      %p134 = por %p132, %p133
      %s136 = sadd.s32 %s135, 1
      %p139 = scmp.eq.s32.totalorder %s19, 1
      %p140 = scmp.ne.s32.totalorder %s135, %s137
      %p141 = scmp.eq.s32.totalorder %s19, 0
      %p142 = por %p140, %p141
      %p143 = scmp.ne.s32.totalorder %s135, %s137
      %p144 = scmp.eq.s32.totalorder %s24, 1
      %p145 = por %p143, %p144
      %p146 = scmp.ne.s32.totalorder %s137, %s138
      %p147 = scmp.eq.s32.totalorder %s24, 0
      %p148 = por %p146, %p147
      %p149 = scmp.ne.s32.totalorder %s137, %s138
      %p150 = scmp.eq.s32.totalorder %s25, 1
      %p151 = por %p149, %p150
      %p153 = scmp.ne.s32.totalorder %s138, %s152
      %p154 = scmp.eq.s32.totalorder %s25, 0
      %p155 = por %p153, %p154
      %s157 = sadd.s32 %s156, 1
      %p160 = scmp.eq.s32.totalorder %s19, 1
      %p161 = scmp.ne.s32.totalorder %s156, %s158
      %p162 = scmp.eq.s32.totalorder %s19, 0
      %p163 = por %p161, %p162
      %p164 = scmp.ne.s32.totalorder %s156, %s158
      %p165 = scmp.eq.s32.totalorder %s24, 1
      %p166 = por %p164, %p165
      %p167 = scmp.ne.s32.totalorder %s158, %s159
      %p168 = scmp.eq.s32.totalorder %s24, 0
      %p169 = por %p167, %p168
      %p170 = scmp.ne.s32.totalorder %s158, %s159
      %p171 = scmp.eq.s32.totalorder %s25, 1
      %p172 = por %p170, %p171
      %p174 = scmp.ne.s32.totalorder %s159, %s173
      %p175 = scmp.eq.s32.totalorder %s25, 0
      %p176 = por %p174, %p175
      %s178 = sadd.s32 %s177, 1
      %p181 = scmp.eq.s32.totalorder %s19, 1
      %p182 = scmp.ne.s32.totalorder %s177, %s179
      %p183 = scmp.eq.s32.totalorder %s19, 0
      %p184 = por %p182, %p183
      %p185 = scmp.ne.s32.totalorder %s177, %s179
      %p186 = scmp.eq.s32.totalorder %s24, 1
      %p187 = por %p185, %p186
      %p188 = scmp.ne.s32.totalorder %s179, %s180
      %p189 = scmp.eq.s32.totalorder %s24, 0
      %p190 = por %p188, %p189
      %p191 = scmp.ne.s32.totalorder %s179, %s180
      %p192 = scmp.eq.s32.totalorder %s25, 1
      %p193 = por %p191, %p192
      %p195 = scmp.ne.s32.totalorder %s180, %s194
      %p196 = scmp.eq.s32.totalorder %s25, 0
      %p197 = por %p195, %p196
      %s198 = ssub.s32 %s26, %s38
      %p199 = scmp.eq.s32.totalorder %s198, 0
      %s201 = sadd.s32 %s200, 1
      %s202 = scalar_select %p199, %s200, %s201
      %p205 = pneg %p199
      %p206 = scmp.eq.s32.totalorder %s19, 1
      %p207 = por %p205, %p206
      %p208 = scmp.ne.s32.totalorder %s200, %s203
      %p209 = scmp.eq.s32.totalorder %s19, 0
      %p210 = por %p208, %p209
      %p211 = scmp.ne.s32.totalorder %s200, %s203
      %p212 = scmp.eq.s32.totalorder %s24, 1
      %p213 = por %p211, %p212
      %p214 = scmp.ne.s32.totalorder %s203, %s204
      %p215 = scmp.eq.s32.totalorder %s24, 0
      %p216 = por %p214, %p215
      %p217 = scmp.ne.s32.totalorder %s203, %s204
      %p218 = scmp.eq.s32.totalorder %s25, 1
      %p219 = por %p217, %p218
      %p221 = scmp.ne.s32.totalorder %s204, %s220
      %p222 = scmp.eq.s32.totalorder %s25, 0
      %p223 = por %p221, %p222
      %p224 = scmp.le.s32.totalorder 1, %s19
      %p225 = scmp.lt.s32.totalorder %s19, 3
      %p226 = pnand %p224, %p225
      %p227 = pneg %p226
      // Predicated region
      $region9: #{tpu_custom_call.1} parent=5 // pred_check
        _
      $region10: #{tpu_custom_call.1} parent=5 // pred_check_branch
        %229 = sbr.rel (%p226) target = $region12
      $region11: #{tpu_custom_call.1} parent=5 // pred_region
        %s230 = ssub.s32 %s19, 1
        // Predicated region
        $region13: #{tpu_custom_call.1} parent=11 // pred_check
          %p231 = pneg %p85
        $region14: #{tpu_custom_call.1} parent=11 // pred_check_branch
          %233 = sbr.rel (%p231) target = $region16
        $region15: #{tpu_custom_call.1} parent=11 // pred_region
          %p234 = scmp.lt.s32.totalorder %s28, 0
          %s235 = scalar_select %p234, %s28, 0
          %s236 = smul.addr %s235, 8
          %s237 = scalar_lea.vmem %s1, %s236
        $region16: #{tpu_custom_call.1} parent=11 // pred_fallthru
          _
        // Predicated region
        $region17: #{tpu_custom_call.1} parent=11 // pred_check
          %p238 = pneg %p106
        $region18: #{tpu_custom_call.1} parent=11 // pred_check_branch
          %240 = sbr.rel (%p238) target = $region20
        $region19: #{tpu_custom_call.1} parent=11 // pred_region
          %242 = vsyncadd [#allocation8], 0
          %s243 = sshll.u32 %s2, 4
          %s244 = int_to_ptr.hbm [resolvable:$true] %s243
          %s245 = sshll.u32 [#allocation7], 4
          %s246 = int_to_ptr.vmem [resolvable:$true] %s245
          %251 = dma.hbm_to_vmem [thread:$0]  %s244, 1024, %s246, [#allocation8], 512, 512, 32
        $region20: #{tpu_custom_call.1} parent=11 // pred_fallthru
          _
        // Predicated region
        $region21: #{tpu_custom_call.1} parent=11 // pred_check
          %p252 = pneg %p127
        $region22: #{tpu_custom_call.1} parent=11 // pred_check_branch
          %254 = sbr.rel (%p252) target = $region24
        $region23: #{tpu_custom_call.1} parent=11 // pred_region
          %256 = vsyncadd [#allocation8], 0
          %s257 = sshll.u32 %s3, 4
          %s258 = int_to_ptr.hbm [resolvable:$true] %s257
          %s259 = sshll.u32 [#allocation9], 4
          %s260 = int_to_ptr.vmem [resolvable:$true] %s259
          %265 = dma.hbm_to_vmem [thread:$0]  %s258, 8192, %s260, [#allocation8], 512, 512, 32
        $region24: #{tpu_custom_call.1} parent=11 // pred_fallthru
          _
        // Predicated region
        $region25: #{tpu_custom_call.1} parent=11 // pred_check
          %p266 = pneg %p148
        $region26: #{tpu_custom_call.1} parent=11 // pred_check_branch
          %268 = sbr.rel (%p266) target = $region28
        $region27: #{tpu_custom_call.1} parent=11 // pred_region
          _
        $region28: #{tpu_custom_call.1} parent=11 // pred_fallthru
          _
        // Predicated region
        $region29: #{tpu_custom_call.1} parent=11 // pred_check
          %p269 = pneg %p169
        $region30: #{tpu_custom_call.1} parent=11 // pred_check_branch
          %271 = sbr.rel (%p269) target = $region32
        $region31: #{tpu_custom_call.1} parent=11 // pred_region
          %273 = vsyncadd [#allocation11], 0
          %s274 = sshll.u32 %s5, 4
          %s275 = int_to_ptr.hbm [resolvable:$true] %s274
          %s276 = sshll.u32 [#allocation10], 4
          %s277 = int_to_ptr.vmem [resolvable:$true] %s276
          %282 = dma.hbm_to_vmem [thread:$0]  %s275, 2048, %s277, [#allocation11], 128, 128, 8
        $region32: #{tpu_custom_call.1} parent=11 // pred_fallthru
          _
        // Predicated region
        $region33: #{tpu_custom_call.1} parent=11 // pred_check
          %p283 = pneg %p190
        $region34: #{tpu_custom_call.1} parent=11 // pred_check_branch
          %285 = sbr.rel (%p283) target = $region36
        $region35: #{tpu_custom_call.1} parent=11 // pred_region
          _
        $region36: #{tpu_custom_call.1} parent=11 // pred_fallthru
          _
      $region12: #{tpu_custom_call.1} parent=5 // pred_fallthru
        _
      %p286 = scmp.lt.s32.totalorder %s19, 2
      // Predicated region
      $region37: #{tpu_custom_call.1} parent=5 // pred_check
        %p287 = pneg %p286
      $region38: #{tpu_custom_call.1} parent=5 // pred_check_branch
        %289 = sbr.rel (%p287) target = $region40
      $region39: #{tpu_custom_call.1} parent=5 // pred_region
        // Predicated region
        $region41: #{tpu_custom_call.1} parent=39 // pred_check
          %p290 = pneg %p53
        $region42: #{tpu_custom_call.1} parent=39 // pred_check_branch
          %292 = sbr.rel (%p290) target = $region44
        $region43: #{tpu_custom_call.1} parent=39 // pred_region
          %s293 = sand.u32 %s43, 1
          %s294 = scalar_lea.sflag [#allocation5], %s293
          %s295 = sand.u32 %s43, 1
          %s296 = smul.addr %s295, 32
          %s297 = scalar_lea.vmem [#allocation4], %s296
          %s298 = smul.u32 4, %s27
          %300 = vsyncadd %s294, 0
          %s301 = sadd.s32 %s26, %s298
          %s302 = smul.addr %s301, 8
          %s303 = scalar_lea.hbm %s0, %s302
          %s304 = sshll.u32 %s303, 4
          %s305 = int_to_ptr.hbm [resolvable:$true] %s304
          %s306 = sshll.u32 %s297, 4
          %s307 = int_to_ptr.vmem [resolvable:$true] %s306
          %312 = dma.hbm_to_vmem [thread:$0]  %s305, 512, %s307, %s294, 128, 128, 8
        $region44: #{tpu_custom_call.1} parent=39 // pred_fallthru
          _
      $region40: #{tpu_custom_call.1} parent=5 // pred_fallthru
        _
      %p313 = scmp.le.s32.totalorder 1, %s19
      %p314 = scmp.lt.s32.totalorder %s19, 3
      %p315 = pnand %p313, %p314
      %p316 = pneg %p315
      // Predicated region
      $region45: #{tpu_custom_call.1} parent=5 // pred_check
        _
      $region46: #{tpu_custom_call.1} parent=5 // pred_check_branch
        %318 = sbr.rel (%p315) target = $region48
      $region47: #{tpu_custom_call.1} parent=5 // pred_region
        %s319 = ssub.s32 %s19, 1
        %s320 = sand.u32 %s46, 1
        %s321 = scalar_lea.sflag [#allocation5], %s320
        %s322 = sand.u32 %s46, 1
        %s323 = smul.addr %s322, 32
        %s324 = scalar_lea.vmem [#allocation4], %s323
        // Predicated region
        $region49: #{tpu_custom_call.1} parent=47 // pred_check
          %p325 = pneg %p59
        $region50: #{tpu_custom_call.1} parent=47 // pred_check_branch
          %327 = sbr.rel (%p325) target = $region52
        $region51: #{tpu_custom_call.1} parent=47 // pred_region
          %329 = dma.done %s321, 512
        $region52: #{tpu_custom_call.1} parent=47 // pred_fallthru
          _
        // Predicated region
        $region53: #{tpu_custom_call.1} parent=47 // pred_check
          %p330 = pneg %p106
        $region54: #{tpu_custom_call.1} parent=47 // pred_check_branch
          %332 = sbr.rel (%p330) target = $region56
        $region55: #{tpu_custom_call.1} parent=47 // pred_region
          %334 = dma.done [#allocation8], 1024
        $region56: #{tpu_custom_call.1} parent=47 // pred_fallthru
          _
        // Predicated region
        $region57: #{tpu_custom_call.1} parent=47 // pred_check
          %p335 = pneg %p127
        $region58: #{tpu_custom_call.1} parent=47 // pred_check_branch
          %337 = sbr.rel (%p335) target = $region60
        $region59: #{tpu_custom_call.1} parent=47 // pred_region
          %339 = dma.done [#allocation8], 8192
        $region60: #{tpu_custom_call.1} parent=47 // pred_fallthru
          _
        // Predicated region
        $region61: #{tpu_custom_call.1} parent=47 // pred_check
          %p340 = pneg %p169
        $region62: #{tpu_custom_call.1} parent=47 // pred_check_branch
          %342 = sbr.rel (%p340) target = $region64
        $region63: #{tpu_custom_call.1} parent=47 // pred_region
          %344 = dma.done [#allocation11], 2048
        $region64: #{tpu_custom_call.1} parent=47 // pred_fallthru
          _
        %s345 = sand.u32 %s46, 1
        %s346 = scalar_lea.sflag [#allocation5], %s345
        %s347 = sand.u32 %s46, 1
        %s348 = smul.addr %s347, 32
        %s349 = scalar_lea.vmem [#allocation4], %s348
        %p350 = pneg %p59
        %p351 = pneg %p56
        %p352 = scmp.lt.s32.totalorder %s28, 0
        %s353 = scalar_select %p352, %s28, 0
        %s354 = smul.addr %s353, 8
        %s355 = scalar_lea.vmem %s1, %s354
        %p356 = pneg %p85
        %p357 = pneg %p82
        %p358 = pneg %p106
        %p359 = pneg %p103
        %p360 = pneg %p127
        %p361 = pneg %p124
        %p362 = pneg %p148
        %p363 = pneg %p145
        %p364 = pneg %p169
        %p365 = pneg %p166
        %p366 = pneg %p190
        %p367 = pneg %p187
        %p368 = pneg %p216
        %p369 = pneg %p213
        %s370 = smul.u32 4, %s29
        %p371 = scmp.lt.s32.totalorder %s28, 0
        %s372 = scalar_select %p371, %s28, 0
        %s373 = smul.addr %s372, 8
        %s374 = scalar_lea.vmem %s1, %s373
        %p375 = scmp.eq.s32.totalorder %s29, 0
        // Predicated region
        $region65: #{tpu_custom_call.1} parent=47 // pred_check
          %p376 = pneg %p375
        $region66: #{tpu_custom_call.1} parent=47 // pred_check_branch
          %378 = sbr.rel (%p376) target = $region68
        $region67: #{tpu_custom_call.1} parent=47 // pred_region
          %379 = vst [vmem:[#allocation2] sm:$0xff] 0.0
          %380 = vst [vmem:[#allocation3] sm:$0xff] 0.0
        $region68: #{tpu_custom_call.1} parent=47 // pred_fallthru
          _
        %v381 = vld [vmem:[%s324] sm:$0xff]
        %v382 = vld [vmem:[%s324 + $0x8] sm:$0xff]
        %v383 = vld [vmem:[%s324 + $0x10] sm:$0xff]
        %v384 = vld [vmem:[%s324 + $0x18] sm:$0xff]
        %v385 = vld [vmem:[#allocation7] sm:$0xff]
        %v386 = vld [vmem:[#allocation7 + $0x8] sm:$0xff]
        %v387 = vld [vmem:[#allocation7 + $0x10] sm:$0xff]
        %v388 = vld [vmem:[#allocation7 + $0x18] sm:$0xff]
        %v389 = vld [vmem:[#allocation7 + $0x20] sm:$0xff]
        %v390 = vld [vmem:[#allocation7 + $0x28] sm:$0xff]
        %v391 = vld [vmem:[#allocation7 + $0x30] sm:$0xff]
        %v392 = vld [vmem:[#allocation7 + $0x38] sm:$0xff]
        %v393 = vld [vmem:[%s4] sm:$0xf]
        %v395 = vperm.slane %v393, 0
        %v396 = vperm.slane %v393, 1
        %v397 = vperm.slane %v393, 2
        %v398 = vperm.slane %v393, 3
        %vm403 = vcmask 130048
        %v405 = vsel %vm403, %v381, 0
        %v408 = vsel %vm403, %v382, 0
        %v411 = vsel %vm403, %v383, 0
        %v414 = vsel %vm403, %v384, 0
        %416 = vmatpush.msra.mxu0 0.0
        %417 = vmatpush.msra.mxu0 0.0
        %418 = vmatpush.msra.mxu0 0.0
        %419 = vmatpush.msra.mxu0 0.0
        %420 = vmatpush.msra.mxu0 0.0
        %421 = vmatpush.msra.mxu0 0.0
        %422 = vmatpush.msra.mxu0 0.0
        %423 = vmatpush.msra.mxu0 0.0
        %424 = vmatpush.msra.mxu0 0.0
        %425 = vmatpush.msra.mxu0 0.0
        %426 = vmatpush.msra.mxu0 0.0
        %427 = vmatpush.msra.mxu0 0.0
        %428 = vmatpush.msra.mxu0 0.0
        %429 = vmatpush.msra.mxu0 0.0
        %430 = vmatpush.msra.mxu0 %v389
        %431 = vmatpush.msra.mxu0 %v385
        %432 = vmatmul.f32.gmra.mxu0 %v405
        %v433 = vpop.f32.mrf.mxu0
        %v434 = vadd.f32 %v395, %v433
        %435 = vmatmul.f32.gmra.mxu0 %v408
        %v436 = vpop.f32.mrf.mxu0
        %v437 = vadd.f32 %v395, %v436
        %438 = vmatmul.f32.gmra.mxu0 %v411
        %v439 = vpop.f32.mrf.mxu0
        %v440 = vadd.f32 %v395, %v439
        %441 = vmatmul.f32.gmra.mxu0 %v414
        %v442 = vpop.f32.mrf.mxu0
        %v443 = vadd.f32 %v395, %v442
        %444 = vdwg.mxu0
        %445 = vmatpush.msra.mxu0 0.0
        %446 = vmatpush.msra.mxu0 0.0
        %447 = vmatpush.msra.mxu0 0.0
        %448 = vmatpush.msra.mxu0 0.0
        %449 = vmatpush.msra.mxu0 0.0
        %450 = vmatpush.msra.mxu0 0.0
        %451 = vmatpush.msra.mxu0 0.0
        %452 = vmatpush.msra.mxu0 0.0
        %453 = vmatpush.msra.mxu0 0.0
        %454 = vmatpush.msra.mxu0 0.0
        %455 = vmatpush.msra.mxu0 0.0
        %456 = vmatpush.msra.mxu0 0.0
        %457 = vmatpush.msra.mxu0 0.0
        %458 = vmatpush.msra.mxu0 0.0
        %459 = vmatpush.msra.mxu0 %v390
        %460 = vmatpush.msra.mxu0 %v386
        %461 = vmatmul.f32.gmra.mxu0 %v405
        %v462 = vpop.f32.mrf.mxu0
        %v463 = vadd.f32 %v396, %v462
        %464 = vmatmul.f32.gmra.mxu0 %v408
        %v465 = vpop.f32.mrf.mxu0
        %v466 = vadd.f32 %v396, %v465
        %467 = vmatmul.f32.gmra.mxu0 %v411
        %v468 = vpop.f32.mrf.mxu0
        %v469 = vadd.f32 %v396, %v468
        %470 = vmatmul.f32.gmra.mxu0 %v414
        %v471 = vpop.f32.mrf.mxu0
        %v472 = vadd.f32 %v396, %v471
        %473 = vdwg.mxu0
        %474 = vmatpush.msra.mxu0 0.0
        %475 = vmatpush.msra.mxu0 0.0
        %476 = vmatpush.msra.mxu0 0.0
        %477 = vmatpush.msra.mxu0 0.0
        %478 = vmatpush.msra.mxu0 0.0
        %479 = vmatpush.msra.mxu0 0.0
        %480 = vmatpush.msra.mxu0 0.0
        %481 = vmatpush.msra.mxu0 0.0
        %482 = vmatpush.msra.mxu0 0.0
        %483 = vmatpush.msra.mxu0 0.0
        %484 = vmatpush.msra.mxu0 0.0
        %485 = vmatpush.msra.mxu0 0.0
        %486 = vmatpush.msra.mxu0 0.0
        %487 = vmatpush.msra.mxu0 0.0
        %488 = vmatpush.msra.mxu0 %v391
        %489 = vmatpush.msra.mxu0 %v387
        %490 = vmatmul.f32.gmra.mxu0 %v405
        %v491 = vpop.f32.mrf.mxu0
        %v492 = vadd.f32 %v397, %v491
        %493 = vmatmul.f32.gmra.mxu0 %v408
        %v494 = vpop.f32.mrf.mxu0
        %v495 = vadd.f32 %v397, %v494
        %496 = vmatmul.f32.gmra.mxu0 %v411
        %v497 = vpop.f32.mrf.mxu0
        %v498 = vadd.f32 %v397, %v497
        %499 = vmatmul.f32.gmra.mxu0 %v414
        %v500 = vpop.f32.mrf.mxu0
        %v501 = vadd.f32 %v397, %v500
        %502 = vdwg.mxu0
        %503 = vmatpush.msra.mxu0 0.0
        %504 = vmatpush.msra.mxu0 0.0
        %505 = vmatpush.msra.mxu0 0.0
        %506 = vmatpush.msra.mxu0 0.0
        %507 = vmatpush.msra.mxu0 0.0
        %508 = vmatpush.msra.mxu0 0.0
        %509 = vmatpush.msra.mxu0 0.0
        %510 = vmatpush.msra.mxu0 0.0
        %511 = vmatpush.msra.mxu0 0.0
        %512 = vmatpush.msra.mxu0 0.0
        %513 = vmatpush.msra.mxu0 0.0
        %514 = vmatpush.msra.mxu0 0.0
        %515 = vmatpush.msra.mxu0 0.0
        %516 = vmatpush.msra.mxu0 0.0
        %517 = vmatpush.msra.mxu0 %v392
        %518 = vmatpush.msra.mxu0 %v388
        %519 = vmatmul.f32.gmra.mxu0 %v405
        %v520 = vpop.f32.mrf.mxu0
        %v521 = vadd.f32 %v398, %v520
        %522 = vmatmul.f32.gmra.mxu0 %v408
        %v523 = vpop.f32.mrf.mxu0
        %v524 = vadd.f32 %v398, %v523
        %525 = vmatmul.f32.gmra.mxu0 %v411
        %v526 = vpop.f32.mrf.mxu0
        %v527 = vadd.f32 %v398, %v526
        %528 = vmatmul.f32.gmra.mxu0 %v414
        %v529 = vpop.f32.mrf.mxu0
        %v530 = vadd.f32 %v398, %v529
        %531 = vdwg.mxu0
        %v532 = vld [vmem:[%s374] sm:$0xff]
        %v533 = vld [vmem:[#allocation9] sm:$0xff]
        %v534 = vld [vmem:[#allocation9 + $0x8] sm:$0xff]
        %v535 = vld [vmem:[#allocation9 + $0x10] sm:$0xff]
        %v536 = vld [vmem:[#allocation9 + $0x18] sm:$0xff]
        %v537 = vld [vmem:[#allocation9 + $0x20] sm:$0xff]
        %v538 = vld [vmem:[#allocation9 + $0x28] sm:$0xff]
        %v539 = vld [vmem:[#allocation9 + $0x30] sm:$0xff]
        %v540 = vld [vmem:[#allocation9 + $0x38] sm:$0xff]
        %v541 = vld [vmem:[#allocation9 + $0x40] sm:$0xff]
        %v542 = vld [vmem:[#allocation9 + $0x48] sm:$0xff]
        %v543 = vld [vmem:[#allocation9 + $0x50] sm:$0xff]
        %v544 = vld [vmem:[#allocation9 + $0x58] sm:$0xff]
        %v545 = vld [vmem:[#allocation9 + $0x60] sm:$0xff]
        %v546 = vld [vmem:[#allocation9 + $0x68] sm:$0xff]
        %v547 = vld [vmem:[#allocation9 + $0x70] sm:$0xff]
        %v548 = vld [vmem:[#allocation9 + $0x78] sm:$0xff]
        %v549 = vld [vmem:[#allocation9 + $0x80] sm:$0xff]
        %v550 = vld [vmem:[#allocation9 + $0x88] sm:$0xff]
        %v551 = vld [vmem:[#allocation9 + $0x90] sm:$0xff]
        %v552 = vld [vmem:[#allocation9 + $0x98] sm:$0xff]
        %v553 = vld [vmem:[#allocation9 + $0xa0] sm:$0xff]
        %v554 = vld [vmem:[#allocation9 + $0xa8] sm:$0xff]
        %v555 = vld [vmem:[#allocation9 + $0xb0] sm:$0xff]
        %v556 = vld [vmem:[#allocation9 + $0xb8] sm:$0xff]
        %v557 = vld [vmem:[#allocation9 + $0xc0] sm:$0xff]
        %v558 = vld [vmem:[#allocation9 + $0xc8] sm:$0xff]
        %v559 = vld [vmem:[#allocation9 + $0xd0] sm:$0xff]
        %v560 = vld [vmem:[#allocation9 + $0xd8] sm:$0xff]
        %v561 = vld [vmem:[#allocation9 + $0xe0] sm:$0xff]
        %v562 = vld [vmem:[#allocation9 + $0xe8] sm:$0xff]
        %v563 = vld [vmem:[#allocation9 + $0xf0] sm:$0xff]
        %v564 = vld [vmem:[#allocation9 + $0xf8] sm:$0xff]
        %v565 = vld [vmem:[#allocation9 + $0x100] sm:$0xff]
        %v566 = vld [vmem:[#allocation9 + $0x108] sm:$0xff]
        %v567 = vld [vmem:[#allocation9 + $0x110] sm:$0xff]
        %v568 = vld [vmem:[#allocation9 + $0x118] sm:$0xff]
        %v569 = vld [vmem:[#allocation9 + $0x120] sm:$0xff]
        %v570 = vld [vmem:[#allocation9 + $0x128] sm:$0xff]
        %v571 = vld [vmem:[#allocation9 + $0x130] sm:$0xff]
        %v572 = vld [vmem:[#allocation9 + $0x138] sm:$0xff]
        %v573 = vld [vmem:[#allocation9 + $0x140] sm:$0xff]
        %v574 = vld [vmem:[#allocation9 + $0x148] sm:$0xff]
        %v575 = vld [vmem:[#allocation9 + $0x150] sm:$0xff]
        %v576 = vld [vmem:[#allocation9 + $0x158] sm:$0xff]
        %v577 = vld [vmem:[#allocation9 + $0x160] sm:$0xff]
        %v578 = vld [vmem:[#allocation9 + $0x168] sm:$0xff]
        %v579 = vld [vmem:[#allocation9 + $0x170] sm:$0xff]
        %v580 = vld [vmem:[#allocation9 + $0x178] sm:$0xff]
        %v581 = vld [vmem:[#allocation9 + $0x180] sm:$0xff]
        %v582 = vld [vmem:[#allocation9 + $0x188] sm:$0xff]
        %v583 = vld [vmem:[#allocation9 + $0x190] sm:$0xff]
        %v584 = vld [vmem:[#allocation9 + $0x198] sm:$0xff]
        %v585 = vld [vmem:[#allocation9 + $0x1a0] sm:$0xff]
        %v586 = vld [vmem:[#allocation9 + $0x1a8] sm:$0xff]
        %v587 = vld [vmem:[#allocation9 + $0x1b0] sm:$0xff]
        %v588 = vld [vmem:[#allocation9 + $0x1b8] sm:$0xff]
        %v589 = vld [vmem:[#allocation9 + $0x1c0] sm:$0xff]
        %v590 = vld [vmem:[#allocation9 + $0x1c8] sm:$0xff]
        %v591 = vld [vmem:[#allocation9 + $0x1d0] sm:$0xff]
        %v592 = vld [vmem:[#allocation9 + $0x1d8] sm:$0xff]
        %v593 = vld [vmem:[#allocation9 + $0x1e0] sm:$0xff]
        %v594 = vld [vmem:[#allocation9 + $0x1e8] sm:$0xff]
        %v595 = vld [vmem:[#allocation9 + $0x1f0] sm:$0xff]
        %v596 = vld [vmem:[#allocation9 + $0x1f8] sm:$0xff]
        %s597 = smul.u32 %s29, 4
        %v598 = vld [vmem:[#allocation2] sm:$0xff]
        %v599 = vld [vmem:[#allocation3] sm:$0xff]
        %600 = vmatpush.msra.mxu0 %v593
        %601 = vmatpush.msra.mxu0 %v589
        %602 = vmatpush.msra.mxu0 %v585
        %603 = vmatpush.msra.mxu0 %v581
        %604 = vmatpush.msra.mxu0 %v577
        %605 = vmatpush.msra.mxu0 %v573
        %606 = vmatpush.msra.mxu0 %v569
        %607 = vmatpush.msra.mxu0 %v565
        %608 = vmatpush.msra.mxu0 %v561
        %609 = vmatpush.msra.mxu0 %v557
        %610 = vmatpush.msra.mxu0 %v553
        %611 = vmatpush.msra.mxu0 %v549
        %612 = vmatpush.msra.mxu0 %v545
        %613 = vmatpush.msra.mxu0 %v541
        %614 = vmatpush.msra.mxu0 %v537
        %615 = vmatpush.msra.mxu0 %v533
        %616 = vmatmul.f32.gmra.mxu0 %v598
        %v617 = vpop.f32.mrf.mxu0
        %v618 = vadd.f32 0.0, %v617
        %619 = vdwg.mxu0
        %620 = vmatpush.msra.mxu0 %v594
        %621 = vmatpush.msra.mxu0 %v590
        %622 = vmatpush.msra.mxu0 %v586
        %623 = vmatpush.msra.mxu0 %v582
        %624 = vmatpush.msra.mxu0 %v578
        %625 = vmatpush.msra.mxu0 %v574
        %626 = vmatpush.msra.mxu0 %v570
        %627 = vmatpush.msra.mxu0 %v566
        %628 = vmatpush.msra.mxu0 %v562
        %629 = vmatpush.msra.mxu0 %v558
        %630 = vmatpush.msra.mxu0 %v554
        %631 = vmatpush.msra.mxu0 %v550
        %632 = vmatpush.msra.mxu0 %v546
        %633 = vmatpush.msra.mxu0 %v542
        %634 = vmatpush.msra.mxu0 %v538
        %635 = vmatpush.msra.mxu0 %v534
        %636 = vmatmul.f32.gmra.mxu0 %v598
        %v637 = vpop.f32.mrf.mxu0
        %v638 = vadd.f32 0.0, %v637
        %639 = vdwg.mxu0
        %640 = vmatpush.msra.mxu0 %v595
        %641 = vmatpush.msra.mxu0 %v591
        %642 = vmatpush.msra.mxu0 %v587
        %643 = vmatpush.msra.mxu0 %v583
        %644 = vmatpush.msra.mxu0 %v579
        %645 = vmatpush.msra.mxu0 %v575
        %646 = vmatpush.msra.mxu0 %v571
        %647 = vmatpush.msra.mxu0 %v567
        %648 = vmatpush.msra.mxu0 %v563
        %649 = vmatpush.msra.mxu0 %v559
        %650 = vmatpush.msra.mxu0 %v555
        %651 = vmatpush.msra.mxu0 %v551
        %652 = vmatpush.msra.mxu0 %v547
        %653 = vmatpush.msra.mxu0 %v543
        %654 = vmatpush.msra.mxu0 %v539
        %655 = vmatpush.msra.mxu0 %v535
        %656 = vmatmul.f32.gmra.mxu0 %v598
        %v657 = vpop.f32.mrf.mxu0
        %v658 = vadd.f32 0.0, %v657
        %659 = vdwg.mxu0
        %660 = vmatpush.msra.mxu0 %v596
        %661 = vmatpush.msra.mxu0 %v592
        %662 = vmatpush.msra.mxu0 %v588
        %663 = vmatpush.msra.mxu0 %v584
        %664 = vmatpush.msra.mxu0 %v580
        %665 = vmatpush.msra.mxu0 %v576
        %666 = vmatpush.msra.mxu0 %v572
        %667 = vmatpush.msra.mxu0 %v568
        %668 = vmatpush.msra.mxu0 %v564
        %669 = vmatpush.msra.mxu0 %v560
        %670 = vmatpush.msra.mxu0 %v556
        %671 = vmatpush.msra.mxu0 %v552
        %672 = vmatpush.msra.mxu0 %v548
        %673 = vmatpush.msra.mxu0 %v544
        %674 = vmatpush.msra.mxu0 %v540
        %675 = vmatpush.msra.mxu0 %v536
        %676 = vmatmul.f32.gmra.mxu0 %v598
        %v677 = vpop.f32.mrf.mxu0
        %v678 = vadd.f32 0.0, %v677
        %679 = vdwg.mxu0
        %v680 = vadd.f32 %v434, %v618
        %v681 = vadd.f32 %v463, %v638
        %v682 = vadd.f32 %v492, %v658
        %v683 = vadd.f32 %v521, %v678
        %v684 = vxor.u32 %v680, 2147483648
        %v685 = vmul.f32 %v684, 1.442695
        %v686 = vpow.pop %v685
        %v687 = vadd.f32 %v686, 1.0
        %v688 = vrcp.pop %v687
        %v689 = vmul.f32 %v687, %v688
        %v690 = vsub.f32 1.0, %v689
        %v691 = vmul.f32 %v688, %v690
        %v692 = vadd.f32 %v688, %v691
        %vm693 = vweird.f32 %v687
        %vm694 = vweird.f32 %v688
        %vm695 = vmor %vm693, %vm694
        %v696 = vsel %vm695, %v688, %v692
        %v697 = vand.u32 2147483647, %v687
        %vm698 = vcmp.eq.f32.partialorder %v697, 8.507059e+37
        %v699 = vand.u32 %v687, 2147483648
        %v700 = vor.u32 1.1754944e-38, %v699
        %v701 = vsel %vm698, %v700, %v696
        %v702 = vmul.f32 1.0, %v701
        %v703 = vxor.u32 %v681, 2147483648
        %v704 = vmul.f32 %v703, 1.442695
        %v705 = vpow.pop %v704
        %v706 = vadd.f32 %v705, 1.0
        %v707 = vrcp.pop %v706
        %v708 = vmul.f32 %v706, %v707
        %v709 = vsub.f32 1.0, %v708
        %v710 = vmul.f32 %v707, %v709
        %v711 = vadd.f32 %v707, %v710
        %vm712 = vweird.f32 %v706
        %vm713 = vweird.f32 %v707
        %vm714 = vmor %vm712, %vm713
        %v715 = vsel %vm714, %v707, %v711
        %v716 = vand.u32 2147483647, %v706
        %vm717 = vcmp.eq.f32.partialorder %v716, 8.507059e+37
        %v718 = vand.u32 %v706, 2147483648
        %v719 = vor.u32 1.1754944e-38, %v718
        %v720 = vsel %vm717, %v719, %v715
        %v721 = vmul.f32 1.0, %v720
        %v722 = vtanh.pop %v682
        %v723 = vxor.u32 %v683, 2147483648
        %v724 = vmul.f32 %v723, 1.442695
        %v725 = vpow.pop %v724
        %v726 = vadd.f32 %v725, 1.0
        %v727 = vrcp.pop %v726
        %v728 = vmul.f32 %v726, %v727
        %v729 = vsub.f32 1.0, %v728
        %v730 = vmul.f32 %v727, %v729
        %v731 = vadd.f32 %v727, %v730
        %vm732 = vweird.f32 %v726
        %vm733 = vweird.f32 %v727
        %vm734 = vmor %vm732, %vm733
        %v735 = vsel %vm734, %v727, %v731
        %v736 = vand.u32 2147483647, %v726
        %vm737 = vcmp.eq.f32.partialorder %v736, 8.507059e+37
        %v738 = vand.u32 %v726, 2147483648
        %v739 = vor.u32 1.1754944e-38, %v738
        %v740 = vsel %vm737, %v739, %v735
        %v741 = vmul.f32 1.0, %v740
        %v742 = vmul.f32 %v721, %v599
        %v743 = vmul.f32 %v702, %v722
        %v744 = vadd.f32 %v742, %v743
        %v745 = vtanh.pop %v744
        %v746 = vmul.f32 %v741, %v745
        %v747 = vstv %s597
        %vm748 = vcmp.gt.s32.totalorder %v532, %v747
        %v749 = vsel %vm748, 1, 0
        %750 = vset.pattern.permute.xlu0 0
        %751 = vperm.xlu0 %750, %v749
        %v752 = vpop.permute.xlu0 %751
        %vm753 = vcmp.eq.s32.totalorder %v752, 1
        %v754 = vsel %vm753, %v746, %v598
        %v755 = vsel %vm753, %v744, %v599
        %756 = vmatpush.msra.mxu0 %v593
        %757 = vmatpush.msra.mxu0 %v589
        %758 = vmatpush.msra.mxu0 %v585
        %759 = vmatpush.msra.mxu0 %v581
        %760 = vmatpush.msra.mxu0 %v577
        %761 = vmatpush.msra.mxu0 %v573
        %762 = vmatpush.msra.mxu0 %v569
        %763 = vmatpush.msra.mxu0 %v565
        %764 = vmatpush.msra.mxu0 %v561
        %765 = vmatpush.msra.mxu0 %v557
        %766 = vmatpush.msra.mxu0 %v553
        %767 = vmatpush.msra.mxu0 %v549
        %768 = vmatpush.msra.mxu0 %v545
        %769 = vmatpush.msra.mxu0 %v541
        %770 = vmatpush.msra.mxu0 %v537
        %771 = vmatpush.msra.mxu0 %v533
        %772 = vmatmul.f32.gmra.mxu0 %v754
        %v773 = vpop.f32.mrf.mxu0
        %v774 = vadd.f32 0.0, %v773
        %775 = vdwg.mxu0
        %776 = vmatpush.msra.mxu0 %v594
        %777 = vmatpush.msra.mxu0 %v590
        %778 = vmatpush.msra.mxu0 %v586
        %779 = vmatpush.msra.mxu0 %v582
        %780 = vmatpush.msra.mxu0 %v578
        %781 = vmatpush.msra.mxu0 %v574
        %782 = vmatpush.msra.mxu0 %v570
        %783 = vmatpush.msra.mxu0 %v566
        %784 = vmatpush.msra.mxu0 %v562
        %785 = vmatpush.msra.mxu0 %v558
        %786 = vmatpush.msra.mxu0 %v554
        %787 = vmatpush.msra.mxu0 %v550
        %788 = vmatpush.msra.mxu0 %v546
        %789 = vmatpush.msra.mxu0 %v542
        %790 = vmatpush.msra.mxu0 %v538
        %791 = vmatpush.msra.mxu0 %v534
        %792 = vmatmul.f32.gmra.mxu0 %v754
        %v793 = vpop.f32.mrf.mxu0
        %v794 = vadd.f32 0.0, %v793
        %795 = vdwg.mxu0
        %796 = vmatpush.msra.mxu0 %v595
        %797 = vmatpush.msra.mxu0 %v591
        %798 = vmatpush.msra.mxu0 %v587
        %799 = vmatpush.msra.mxu0 %v583
        %800 = vmatpush.msra.mxu0 %v579
        %801 = vmatpush.msra.mxu0 %v575
        %802 = vmatpush.msra.mxu0 %v571
        %803 = vmatpush.msra.mxu0 %v567
        %804 = vmatpush.msra.mxu0 %v563
        %805 = vmatpush.msra.mxu0 %v559
        %806 = vmatpush.msra.mxu0 %v555
        %807 = vmatpush.msra.mxu0 %v551
        %808 = vmatpush.msra.mxu0 %v547
        %809 = vmatpush.msra.mxu0 %v543
        %810 = vmatpush.msra.mxu0 %v539
        %811 = vmatpush.msra.mxu0 %v535
        %812 = vmatmul.f32.gmra.mxu0 %v754
        %v813 = vpop.f32.mrf.mxu0
        %v814 = vadd.f32 0.0, %v813
        %815 = vdwg.mxu0
        %816 = vmatpush.msra.mxu0 %v596
        %817 = vmatpush.msra.mxu0 %v592
        %818 = vmatpush.msra.mxu0 %v588
        %819 = vmatpush.msra.mxu0 %v584
        %820 = vmatpush.msra.mxu0 %v580
        %821 = vmatpush.msra.mxu0 %v576
        %822 = vmatpush.msra.mxu0 %v572
        %823 = vmatpush.msra.mxu0 %v568
        %824 = vmatpush.msra.mxu0 %v564
        %825 = vmatpush.msra.mxu0 %v560
        %826 = vmatpush.msra.mxu0 %v556
        %827 = vmatpush.msra.mxu0 %v552
        %828 = vmatpush.msra.mxu0 %v548
        %829 = vmatpush.msra.mxu0 %v544
        %830 = vmatpush.msra.mxu0 %v540
        %831 = vmatpush.msra.mxu0 %v536
        %832 = vmatmul.f32.gmra.mxu0 %v754
        %v833 = vpop.f32.mrf.mxu0
        %v834 = vadd.f32 0.0, %v833
        %835 = vdwg.mxu0
        %v836 = vadd.f32 %v437, %v774
        %v837 = vadd.f32 %v466, %v794
        %v838 = vadd.f32 %v495, %v814
        %v839 = vadd.f32 %v524, %v834
        %v840 = vxor.u32 %v836, 2147483648
        %v841 = vmul.f32 %v840, 1.442695
        %v842 = vpow.pop %v841
        %v843 = vadd.f32 %v842, 1.0
        %v844 = vrcp.pop %v843
        %v845 = vmul.f32 %v843, %v844
        %v846 = vsub.f32 1.0, %v845
        %v847 = vmul.f32 %v844, %v846
        %v848 = vadd.f32 %v844, %v847
        %vm849 = vweird.f32 %v843
        %vm850 = vweird.f32 %v844
        %vm851 = vmor %vm849, %vm850
        %v852 = vsel %vm851, %v844, %v848
        %v853 = vand.u32 2147483647, %v843
        %vm854 = vcmp.eq.f32.partialorder %v853, 8.507059e+37
        %v855 = vand.u32 %v843, 2147483648
        %v856 = vor.u32 1.1754944e-38, %v855
        %v857 = vsel %vm854, %v856, %v852
        %v858 = vmul.f32 1.0, %v857
        %v859 = vxor.u32 %v837, 2147483648
        %v860 = vmul.f32 %v859, 1.442695
        %v861 = vpow.pop %v860
        %v862 = vadd.f32 %v861, 1.0
        %v863 = vrcp.pop %v862
        %v864 = vmul.f32 %v862, %v863
        %v865 = vsub.f32 1.0, %v864
        %v866 = vmul.f32 %v863, %v865
        %v867 = vadd.f32 %v863, %v866
        %vm868 = vweird.f32 %v862
        %vm869 = vweird.f32 %v863
        %vm870 = vmor %vm868, %vm869
        %v871 = vsel %vm870, %v863, %v867
        %v872 = vand.u32 2147483647, %v862
        %vm873 = vcmp.eq.f32.partialorder %v872, 8.507059e+37
        %v874 = vand.u32 %v862, 2147483648
        %v875 = vor.u32 1.1754944e-38, %v874
        %v876 = vsel %vm873, %v875, %v871
        %v877 = vmul.f32 1.0, %v876
        %v878 = vtanh.pop %v838
        %v879 = vxor.u32 %v839, 2147483648
        %v880 = vmul.f32 %v879, 1.442695
        %v881 = vpow.pop %v880
        %v882 = vadd.f32 %v881, 1.0
        %v883 = vrcp.pop %v882
        %v884 = vmul.f32 %v882, %v883
        %v885 = vsub.f32 1.0, %v884
        %v886 = vmul.f32 %v883, %v885
        %v887 = vadd.f32 %v883, %v886
        %vm888 = vweird.f32 %v882
        %vm889 = vweird.f32 %v883
        %vm890 = vmor %vm888, %vm889
        %v891 = vsel %vm890, %v883, %v887
        %v892 = vand.u32 2147483647, %v882
        %vm893 = vcmp.eq.f32.partialorder %v892, 8.507059e+37
        %v894 = vand.u32 %v882, 2147483648
        %v895 = vor.u32 1.1754944e-38, %v894
        %v896 = vsel %vm893, %v895, %v891
        %v897 = vmul.f32 1.0, %v896
        %v898 = vmul.f32 %v877, %v755
        %v899 = vmul.f32 %v858, %v878
        %v900 = vadd.f32 %v898, %v899
        %v901 = vtanh.pop %v900
        %v902 = vmul.f32 %v897, %v901
        %s903 = sadd.s32 %s597, 1
        %v904 = vstv %s903
        %vm905 = vcmp.gt.s32.totalorder %v532, %v904
        %v906 = vsel %vm905, 1, 0
        %907 = vset.pattern.permute.xlu0 0
        %908 = vperm.xlu0 %907, %v906
        %v909 = vpop.permute.xlu0 %908
        %vm910 = vcmp.eq.s32.totalorder %v909, 1
        %v911 = vsel %vm910, %v902, %v754
        %v912 = vsel %vm910, %v900, %v755
        %913 = vmatpush.msra.mxu0 %v593
        %914 = vmatpush.msra.mxu0 %v589
        %915 = vmatpush.msra.mxu0 %v585
        %916 = vmatpush.msra.mxu0 %v581
        %917 = vmatpush.msra.mxu0 %v577
        %918 = vmatpush.msra.mxu0 %v573
        %919 = vmatpush.msra.mxu0 %v569
        %920 = vmatpush.msra.mxu0 %v565
        %921 = vmatpush.msra.mxu0 %v561
        %922 = vmatpush.msra.mxu0 %v557
        %923 = vmatpush.msra.mxu0 %v553
        %924 = vmatpush.msra.mxu0 %v549
        %925 = vmatpush.msra.mxu0 %v545
        %926 = vmatpush.msra.mxu0 %v541
        %927 = vmatpush.msra.mxu0 %v537
        %928 = vmatpush.msra.mxu0 %v533
        %929 = vmatmul.f32.gmra.mxu0 %v911
        %v930 = vpop.f32.mrf.mxu0
        %v931 = vadd.f32 0.0, %v930
        %932 = vdwg.mxu0
        %933 = vmatpush.msra.mxu0 %v594
        %934 = vmatpush.msra.mxu0 %v590
        %935 = vmatpush.msra.mxu0 %v586
        %936 = vmatpush.msra.mxu0 %v582
        %937 = vmatpush.msra.mxu0 %v578
        %938 = vmatpush.msra.mxu0 %v574
        %939 = vmatpush.msra.mxu0 %v570
        %940 = vmatpush.msra.mxu0 %v566
        %941 = vmatpush.msra.mxu0 %v562
        %942 = vmatpush.msra.mxu0 %v558
        %943 = vmatpush.msra.mxu0 %v554
        %944 = vmatpush.msra.mxu0 %v550
        %945 = vmatpush.msra.mxu0 %v546
        %946 = vmatpush.msra.mxu0 %v542
        %947 = vmatpush.msra.mxu0 %v538
        %948 = vmatpush.msra.mxu0 %v534
        %949 = vmatmul.f32.gmra.mxu0 %v911
        %v950 = vpop.f32.mrf.mxu0
        %v951 = vadd.f32 0.0, %v950
        %952 = vdwg.mxu0
        %953 = vmatpush.msra.mxu0 %v595
        %954 = vmatpush.msra.mxu0 %v591
        %955 = vmatpush.msra.mxu0 %v587
        %956 = vmatpush.msra.mxu0 %v583
        %957 = vmatpush.msra.mxu0 %v579
        %958 = vmatpush.msra.mxu0 %v575
        %959 = vmatpush.msra.mxu0 %v571
        %960 = vmatpush.msra.mxu0 %v567
        %961 = vmatpush.msra.mxu0 %v563
        %962 = vmatpush.msra.mxu0 %v559
        %963 = vmatpush.msra.mxu0 %v555
        %964 = vmatpush.msra.mxu0 %v551
        %965 = vmatpush.msra.mxu0 %v547
        %966 = vmatpush.msra.mxu0 %v543
        %967 = vmatpush.msra.mxu0 %v539
        %968 = vmatpush.msra.mxu0 %v535
        %969 = vmatmul.f32.gmra.mxu0 %v911
        %v970 = vpop.f32.mrf.mxu0
        %v971 = vadd.f32 0.0, %v970
        %972 = vdwg.mxu0
        %973 = vmatpush.msra.mxu0 %v596
        %974 = vmatpush.msra.mxu0 %v592
        %975 = vmatpush.msra.mxu0 %v588
        %976 = vmatpush.msra.mxu0 %v584
        %977 = vmatpush.msra.mxu0 %v580
        %978 = vmatpush.msra.mxu0 %v576
        %979 = vmatpush.msra.mxu0 %v572
        %980 = vmatpush.msra.mxu0 %v568
        %981 = vmatpush.msra.mxu0 %v564
        %982 = vmatpush.msra.mxu0 %v560
        %983 = vmatpush.msra.mxu0 %v556
        %984 = vmatpush.msra.mxu0 %v552
        %985 = vmatpush.msra.mxu0 %v548
        %986 = vmatpush.msra.mxu0 %v544
        %987 = vmatpush.msra.mxu0 %v540
        %988 = vmatpush.msra.mxu0 %v536
        %989 = vmatmul.f32.gmra.mxu0 %v911
        %v990 = vpop.f32.mrf.mxu0
        %v991 = vadd.f32 0.0, %v990
        %992 = vdwg.mxu0
        %v993 = vadd.f32 %v440, %v931
        %v994 = vadd.f32 %v469, %v951
        %v995 = vadd.f32 %v498, %v971
        %v996 = vadd.f32 %v527, %v991
        %v997 = vxor.u32 %v993, 2147483648
        %v998 = vmul.f32 %v997, 1.442695
        %v999 = vpow.pop %v998
        %v1000 = vadd.f32 %v999, 1.0
        %v1001 = vrcp.pop %v1000
        %v1002 = vmul.f32 %v1000, %v1001
        %v1003 = vsub.f32 1.0, %v1002
        %v1004 = vmul.f32 %v1001, %v1003
        %v1005 = vadd.f32 %v1001, %v1004
        %vm1006 = vweird.f32 %v1000
        %vm1007 = vweird.f32 %v1001
        %vm1008 = vmor %vm1006, %vm1007
        %v1009 = vsel %vm1008, %v1001, %v1005
        %v1010 = vand.u32 2147483647, %v1000
        %vm1011 = vcmp.eq.f32.partialorder %v1010, 8.507059e+37
        %v1012 = vand.u32 %v1000, 2147483648
        %v1013 = vor.u32 1.1754944e-38, %v1012
        %v1014 = vsel %vm1011, %v1013, %v1009
        %v1015 = vmul.f32 1.0, %v1014
        %v1016 = vxor.u32 %v994, 2147483648
        %v1017 = vmul.f32 %v1016, 1.442695
        %v1018 = vpow.pop %v1017
        %v1019 = vadd.f32 %v1018, 1.0
        %v1020 = vrcp.pop %v1019
        %v1021 = vmul.f32 %v1019, %v1020
        %v1022 = vsub.f32 1.0, %v1021
        %v1023 = vmul.f32 %v1020, %v1022
        %v1024 = vadd.f32 %v1020, %v1023
        %vm1025 = vweird.f32 %v1019
        %vm1026 = vweird.f32 %v1020
        %vm1027 = vmor %vm1025, %vm1026
        %v1028 = vsel %vm1027, %v1020, %v1024
        %v1029 = vand.u32 2147483647, %v1019
        %vm1030 = vcmp.eq.f32.partialorder %v1029, 8.507059e+37
        %v1031 = vand.u32 %v1019, 2147483648
        %v1032 = vor.u32 1.1754944e-38, %v1031
        %v1033 = vsel %vm1030, %v1032, %v1028
        %v1034 = vmul.f32 1.0, %v1033
        %v1035 = vtanh.pop %v995
        %v1036 = vxor.u32 %v996, 2147483648
        %v1037 = vmul.f32 %v1036, 1.442695
        %v1038 = vpow.pop %v1037
        %v1039 = vadd.f32 %v1038, 1.0
        %v1040 = vrcp.pop %v1039
        %v1041 = vmul.f32 %v1039, %v1040
        %v1042 = vsub.f32 1.0, %v1041
        %v1043 = vmul.f32 %v1040, %v1042
        %v1044 = vadd.f32 %v1040, %v1043
        %vm1045 = vweird.f32 %v1039
        %vm1046 = vweird.f32 %v1040
        %vm1047 = vmor %vm1045, %vm1046
        %v1048 = vsel %vm1047, %v1040, %v1044
        %v1049 = vand.u32 2147483647, %v1039
        %vm1050 = vcmp.eq.f32.partialorder %v1049, 8.507059e+37
        %v1051 = vand.u32 %v1039, 2147483648
        %v1052 = vor.u32 1.1754944e-38, %v1051
        %v1053 = vsel %vm1050, %v1052, %v1048
        %v1054 = vmul.f32 1.0, %v1053
        %v1055 = vmul.f32 %v1034, %v912
        %v1056 = vmul.f32 %v1015, %v1035
        %v1057 = vadd.f32 %v1055, %v1056
        %v1058 = vtanh.pop %v1057
        %v1059 = vmul.f32 %v1054, %v1058
        %s1060 = sadd.s32 %s597, 2
        %v1061 = vstv %s1060
        %vm1062 = vcmp.gt.s32.totalorder %v532, %v1061
        %v1063 = vsel %vm1062, 1, 0
        %1064 = vset.pattern.permute.xlu0 0
        %1065 = vperm.xlu0 %1064, %v1063
        %v1066 = vpop.permute.xlu0 %1065
        %vm1067 = vcmp.eq.s32.totalorder %v1066, 1
        %v1068 = vsel %vm1067, %v1059, %v911
        %v1069 = vsel %vm1067, %v1057, %v912
        %1070 = vmatpush.msra.mxu0 %v593
        %1071 = vmatpush.msra.mxu0 %v589
        %1072 = vmatpush.msra.mxu0 %v585
        %1073 = vmatpush.msra.mxu0 %v581
        %1074 = vmatpush.msra.mxu0 %v577
        %1075 = vmatpush.msra.mxu0 %v573
        %1076 = vmatpush.msra.mxu0 %v569
        %1077 = vmatpush.msra.mxu0 %v565
        %1078 = vmatpush.msra.mxu0 %v561
        %1079 = vmatpush.msra.mxu0 %v557
        %1080 = vmatpush.msra.mxu0 %v553
        %1081 = vmatpush.msra.mxu0 %v549
        %1082 = vmatpush.msra.mxu0 %v545
        %1083 = vmatpush.msra.mxu0 %v541
        %1084 = vmatpush.msra.mxu0 %v537
        %1085 = vmatpush.msra.mxu0 %v533
        %1086 = vmatmul.f32.gmra.mxu0 %v1068
        %v1087 = vpop.f32.mrf.mxu0
        %v1088 = vadd.f32 0.0, %v1087
        %1089 = vdwg.mxu0
        %1090 = vmatpush.msra.mxu0 %v594
        %1091 = vmatpush.msra.mxu0 %v590
        %1092 = vmatpush.msra.mxu0 %v586
        %1093 = vmatpush.msra.mxu0 %v582
        %1094 = vmatpush.msra.mxu0 %v578
        %1095 = vmatpush.msra.mxu0 %v574
        %1096 = vmatpush.msra.mxu0 %v570
        %1097 = vmatpush.msra.mxu0 %v566
        %1098 = vmatpush.msra.mxu0 %v562
        %1099 = vmatpush.msra.mxu0 %v558
        %1100 = vmatpush.msra.mxu0 %v554
        %1101 = vmatpush.msra.mxu0 %v550
        %1102 = vmatpush.msra.mxu0 %v546
        %1103 = vmatpush.msra.mxu0 %v542
        %1104 = vmatpush.msra.mxu0 %v538
        %1105 = vmatpush.msra.mxu0 %v534
        %1106 = vmatmul.f32.gmra.mxu0 %v1068
        %v1107 = vpop.f32.mrf.mxu0
        %v1108 = vadd.f32 0.0, %v1107
        %1109 = vdwg.mxu0
        %1110 = vmatpush.msra.mxu0 %v595
        %1111 = vmatpush.msra.mxu0 %v591
        %1112 = vmatpush.msra.mxu0 %v587
        %1113 = vmatpush.msra.mxu0 %v583
        %1114 = vmatpush.msra.mxu0 %v579
        %1115 = vmatpush.msra.mxu0 %v575
        %1116 = vmatpush.msra.mxu0 %v571
        %1117 = vmatpush.msra.mxu0 %v567
        %1118 = vmatpush.msra.mxu0 %v563
        %1119 = vmatpush.msra.mxu0 %v559
        %1120 = vmatpush.msra.mxu0 %v555
        %1121 = vmatpush.msra.mxu0 %v551
        %1122 = vmatpush.msra.mxu0 %v547
        %1123 = vmatpush.msra.mxu0 %v543
        %1124 = vmatpush.msra.mxu0 %v539
        %1125 = vmatpush.msra.mxu0 %v535
        %1126 = vmatmul.f32.gmra.mxu0 %v1068
        %v1127 = vpop.f32.mrf.mxu0
        %v1128 = vadd.f32 0.0, %v1127
        %1129 = vdwg.mxu0
        %1130 = vmatpush.msra.mxu0 %v596
        %1131 = vmatpush.msra.mxu0 %v592
        %1132 = vmatpush.msra.mxu0 %v588
        %1133 = vmatpush.msra.mxu0 %v584
        %1134 = vmatpush.msra.mxu0 %v580
        %1135 = vmatpush.msra.mxu0 %v576
        %1136 = vmatpush.msra.mxu0 %v572
        %1137 = vmatpush.msra.mxu0 %v568
        %1138 = vmatpush.msra.mxu0 %v564
        %1139 = vmatpush.msra.mxu0 %v560
        %1140 = vmatpush.msra.mxu0 %v556
        %1141 = vmatpush.msra.mxu0 %v552
        %1142 = vmatpush.msra.mxu0 %v548
        %1143 = vmatpush.msra.mxu0 %v544
        %1144 = vmatpush.msra.mxu0 %v540
        %1145 = vmatpush.msra.mxu0 %v536
        %1146 = vmatmul.f32.gmra.mxu0 %v1068
        %v1147 = vpop.f32.mrf.mxu0
        %v1148 = vadd.f32 0.0, %v1147
        %1149 = vdwg.mxu0
        %v1150 = vadd.f32 %v443, %v1088
        %v1151 = vadd.f32 %v472, %v1108
        %v1152 = vadd.f32 %v501, %v1128
        %v1153 = vadd.f32 %v530, %v1148
        %v1154 = vxor.u32 %v1150, 2147483648
        %v1155 = vmul.f32 %v1154, 1.442695
        %v1156 = vpow.pop %v1155
        %v1157 = vadd.f32 %v1156, 1.0
        %v1158 = vrcp.pop %v1157
        %v1159 = vmul.f32 %v1157, %v1158
        %v1160 = vsub.f32 1.0, %v1159
        %v1161 = vmul.f32 %v1158, %v1160
        %v1162 = vadd.f32 %v1158, %v1161
        %vm1163 = vweird.f32 %v1157
        %vm1164 = vweird.f32 %v1158
        %vm1165 = vmor %vm1163, %vm1164
        %v1166 = vsel %vm1165, %v1158, %v1162
        %v1167 = vand.u32 2147483647, %v1157
        %vm1168 = vcmp.eq.f32.partialorder %v1167, 8.507059e+37
        %v1169 = vand.u32 %v1157, 2147483648
        %v1170 = vor.u32 1.1754944e-38, %v1169
        %v1171 = vsel %vm1168, %v1170, %v1166
        %v1172 = vmul.f32 1.0, %v1171
        %v1173 = vxor.u32 %v1151, 2147483648
        %v1174 = vmul.f32 %v1173, 1.442695
        %v1175 = vpow.pop %v1174
        %v1176 = vadd.f32 %v1175, 1.0
        %v1177 = vrcp.pop %v1176
        %v1178 = vmul.f32 %v1176, %v1177
        %v1179 = vsub.f32 1.0, %v1178
        %v1180 = vmul.f32 %v1177, %v1179
        %v1181 = vadd.f32 %v1177, %v1180
        %vm1182 = vweird.f32 %v1176
        %vm1183 = vweird.f32 %v1177
        %vm1184 = vmor %vm1182, %vm1183
        %v1185 = vsel %vm1184, %v1177, %v1181
        %v1186 = vand.u32 2147483647, %v1176
        %vm1187 = vcmp.eq.f32.partialorder %v1186, 8.507059e+37
        %v1188 = vand.u32 %v1176, 2147483648
        %v1189 = vor.u32 1.1754944e-38, %v1188
        %v1190 = vsel %vm1187, %v1189, %v1185
        %v1191 = vmul.f32 1.0, %v1190
        %v1192 = vtanh.pop %v1152
        %v1193 = vxor.u32 %v1153, 2147483648
        %v1194 = vmul.f32 %v1193, 1.442695
        %v1195 = vpow.pop %v1194
        %v1196 = vadd.f32 %v1195, 1.0
        %v1197 = vrcp.pop %v1196
        %v1198 = vmul.f32 %v1196, %v1197
        %v1199 = vsub.f32 1.0, %v1198
        %v1200 = vmul.f32 %v1197, %v1199
        %v1201 = vadd.f32 %v1197, %v1200
        %vm1202 = vweird.f32 %v1196
        %vm1203 = vweird.f32 %v1197
        %vm1204 = vmor %vm1202, %vm1203
        %v1205 = vsel %vm1204, %v1197, %v1201
        %v1206 = vand.u32 2147483647, %v1196
        %vm1207 = vcmp.eq.f32.partialorder %v1206, 8.507059e+37
        %v1208 = vand.u32 %v1196, 2147483648
        %v1209 = vor.u32 1.1754944e-38, %v1208
        %v1210 = vsel %vm1207, %v1209, %v1205
        %v1211 = vmul.f32 1.0, %v1210
        %v1212 = vmul.f32 %v1191, %v1069
        %v1213 = vmul.f32 %v1172, %v1192
        %v1214 = vadd.f32 %v1212, %v1213
        %v1215 = vtanh.pop %v1214
        %v1216 = vmul.f32 %v1211, %v1215
        %s1217 = sadd.s32 %s597, 3
        %v1218 = vstv %s1217
        %vm1219 = vcmp.gt.s32.totalorder %v532, %v1218
        %v1220 = vsel %vm1219, 1, 0
        %1221 = vset.pattern.permute.xlu0 0
        %1222 = vperm.xlu0 %1221, %v1220
        %v1223 = vpop.permute.xlu0 %1222
        %vm1224 = vcmp.eq.s32.totalorder %v1223, 1
        %v1225 = vsel %vm1224, %v1216, %v1068
        %v1226 = vsel %vm1224, %v1214, %v1069
        %1227 = vst [vmem:[#allocation2] sm:$0xff] %v1225
        %1228 = vst [vmem:[#allocation3] sm:$0xff] %v1226
        %p1229 = scmp.eq.s32.totalorder %s29, 1
        // Predicated region
        $region69: #{tpu_custom_call.1} parent=47 // pred_check
          %p1230 = pneg %p1229
        $region70: #{tpu_custom_call.1} parent=47 // pred_check_branch
          %1232 = sbr.rel (%p1230) target = $region72
        $region71: #{tpu_custom_call.1} parent=47 // pred_region
          %v1233 = vld [vmem:[#allocation2] sm:$0xff]
          %v1234 = vld [vmem:[#allocation10] sm:$0xff]
          %v1235 = vld [vmem:[#allocation10 + $0x8] sm:$0xff]
          %v1236 = vld [vmem:[#allocation10 + $0x10] sm:$0xff]
          %v1237 = vld [vmem:[#allocation10 + $0x18] sm:$0xff]
          %v1238 = vld [vmem:[#allocation10 + $0x20] sm:$0xff]
          %v1239 = vld [vmem:[#allocation10 + $0x28] sm:$0xff]
          %v1240 = vld [vmem:[#allocation10 + $0x30] sm:$0xff]
          %v1241 = vld [vmem:[#allocation10 + $0x38] sm:$0xff]
          %v1242 = vld [vmem:[#allocation10 + $0x40] sm:$0xff]
          %v1243 = vld [vmem:[#allocation10 + $0x48] sm:$0xff]
          %v1244 = vld [vmem:[#allocation10 + $0x50] sm:$0xff]
          %v1245 = vld [vmem:[#allocation10 + $0x58] sm:$0xff]
          %v1246 = vld [vmem:[#allocation10 + $0x60] sm:$0xff]
          %v1247 = vld [vmem:[#allocation10 + $0x68] sm:$0xff]
          %v1248 = vld [vmem:[#allocation10 + $0x70] sm:$0xff]
          %v1249 = vld [vmem:[#allocation10 + $0x78] sm:$0xff]
          %v1250 = vld [vmem:[%s6] sm:$0x1]
          %v1252 = vperm.slane %v1250, 0
          %1254 = vmatpush.msra.mxu0 %v1249
          %1255 = vmatpush.msra.mxu0 %v1248
          %1256 = vmatpush.msra.mxu0 %v1247
          %1257 = vmatpush.msra.mxu0 %v1246
          %1258 = vmatpush.msra.mxu0 %v1245
          %1259 = vmatpush.msra.mxu0 %v1244
          %1260 = vmatpush.msra.mxu0 %v1243
          %1261 = vmatpush.msra.mxu0 %v1242
          %1262 = vmatpush.msra.mxu0 %v1241
          %1263 = vmatpush.msra.mxu0 %v1240
          %1264 = vmatpush.msra.mxu0 %v1239
          %1265 = vmatpush.msra.mxu0 %v1238
          %1266 = vmatpush.msra.mxu0 %v1237
          %1267 = vmatpush.msra.mxu0 %v1236
          %1268 = vmatpush.msra.mxu0 %v1235
          %1269 = vmatpush.msra.mxu0 %v1234
          %1270 = vmatmul.f32.gmra.mxu0 %v1233
          %v1271 = vpop.f32.mrf.mxu0
          %v1272 = vadd.f32 %v1252, %v1271
          %1273 = vdwg.mxu0
          %1274 = vst [vmem:[#allocation12] sm:$0xff] %v1272
        $region72: #{tpu_custom_call.1} parent=47 // pred_fallthru
          _
        // Predicated region
        $region73: #{tpu_custom_call.1} parent=47 // pred_check
          %p1275 = pneg %p213
        $region74: #{tpu_custom_call.1} parent=47 // pred_check_branch
          %1277 = sbr.rel (%p1275) target = $region76
        $region75: #{tpu_custom_call.1} parent=47 // pred_region
          %1279 = vsyncadd [#allocation6], 0
          %s1280 = smul.addr %s28, 8
          %s1281 = scalar_lea.hbm %s7, %s1280
          %s1283 = sshll.u32 [#allocation12], 4
          %s1284 = int_to_ptr.vmem [resolvable:$true] %s1283
          %s1285 = sshll.u32 %s1281, 4
          %s1286 = int_to_ptr.hbm [resolvable:$true] %s1285
          %1288 = dma.vmem_to_hbm [thread:$0]  %s1284, 128, %s1286, [#allocation6]
        $region76: #{tpu_custom_call.1} parent=47 // pred_fallthru
          _
        // Predicated region
        $region77: #{tpu_custom_call.1} parent=47 // pred_check
          %p1289 = pneg %p213
        $region78: #{tpu_custom_call.1} parent=47 // pred_check_branch
          %1291 = sbr.rel (%p1289) target = $region80
        $region79: #{tpu_custom_call.1} parent=47 // pred_region
          %1293 = dma.done [#allocation6], 128
        $region80: #{tpu_custom_call.1} parent=47 // pred_fallthru
          _
      $region48: #{tpu_custom_call.1} parent=5 // pred_fallthru
        _
      %p1294 = scmp.le.s32.totalorder 2, %s19
      // Predicated region
      $region81: #{tpu_custom_call.1} parent=5 // pred_check
        %p1295 = pneg %p1294
      $region82: #{tpu_custom_call.1} parent=5 // pred_check_branch
        %1297 = sbr.rel (%p1295) target = $region84
      $region83: #{tpu_custom_call.1} parent=5 // pred_region
        %s1298 = ssub.s32 %s19, 2
      $region84: #{tpu_custom_call.1} parent=5 // pred_fallthru
        _
    $region6: #{tpu_custom_call.1} parent=1 // loop_footer
      %s23 = sadd.s32 1, %s19
    $region7: #{tpu_custom_call.1} parent=1 // loop_footer_branch
      %18 = sbr.rel target = $region3
    $region8: #{tpu_custom_call.1} parent=1 // loop_exit
      _
    %1299 = vsyncpa [#allocation5], 1
    %s1300 = scalar_lea.sflag [#allocation5], 1
    %1301 = vsyncpa %s1300, 1
    %1302 = vsyncpa [#allocation8], 1
    %1303 = vsyncpa [#allocation11], 1
    %1304 = vsyncpa [#allocation6], 1
    %s1305 = scalar_lea.sflag [#allocation6], 1
    %1306 = vsyncpa %s1305, 1

</llo_original>
